<compile_context>
chip_gen: v6e
topology: v6e:2x2x1
jax: 0.10.0
libtpu: 0.0.40
codegen_flags: <defaults>
</compile_context>

<pallas_src>
import functools

import jax
import jax.numpy as jnp
from jax.experimental import pallas as pl
from jax.experimental.pallas import tpu as pltpu


_VMEM_BUDGET = 24 << 20        # working-set cap (leaves headroom on v7x's 64 MiB)
_VMEM_LIMIT = 32 << 20         # explicit scoped-VMEM limit passed to Mosaic


def _round_up(x, m):
    return ((x + m - 1) // m) * m


def _mlp_kernel(x_ref, w1_ref, b1_ref, w2_ref, b2_ref, w3_ref, b3_ref, o_ref):
    # x_ref:  (tb, input_dim)   f32
    # w1_ref: (input_dim, 128)  f32,  b1_ref: (1, 128) f32
    # w2_ref: (128, 64)         f32,  b2_ref: (1, 64)  f32
    # w3_ref: (64, emb_dim)     f32,  b3_ref: (1, emb_dim) f32
    x = x_ref[...]

    # Linear(input_dim, 128) + ReLU
    h1 = jnp.dot(x, w1_ref[...], preferred_element_type=jnp.float32) + b1_ref[...]
    h1 = jnp.maximum(h1, 0.0)
    # Dropout(0.2) -> identity in eval mode.
    # TODO(synk): train-mode dropout would need pltpu.prng_seed + prng_random_bits masking.

    # Linear(128, 64) + ReLU
    h2 = jnp.dot(h1, w2_ref[...], preferred_element_type=jnp.float32) + b2_ref[...]
    h2 = jnp.maximum(h2, 0.0)
    # Dropout(0.2) -> identity in eval mode.

    # Linear(64, embedding_dim) -- written directly at the real output width.
    out = jnp.dot(h2, w3_ref[...], preferred_element_type=jnp.float32) + b3_ref[...]
    o_ref[...] = out.astype(o_ref.dtype)


def _choose_tb(batch, input_dim, emb_dim, block_batch):
    """Pick the batch tile.

    Big tiles amortize the ~0.35us/step pipeline overhead; for large batches
    aim for >= 4 grid steps (>= 2 per TensorCore on v7x) so the pipeline can
    overlap DMA with compute.  A VMEM guard keeps the double-buffered working
    set under _VMEM_BUDGET for any input_dim.
    """
    if batch <= 1024:
        tb = batch                                    # single full-extent block
    else:
        tb = min(block_batch, max(8, _round_up(pl.cdiv(batch, 4), 8)))

    def working_set(t):
        stream = 2 * t * (input_dim + emb_dim) * 4    # x + out tiles, double-buffered
        interm = t * (128 + 64) * 4                   # h1 / h2 live values
        weights = 2 * ((input_dim * 128 + 128 * 64 + 64 * emb_dim)
                       + (128 + 64 + emb_dim)) * 4    # resident (double-buffered) params
        return stream + interm + weights

    while tb > 8 and working_set(tb) > _VMEM_BUDGET:
        tb = max(8, _round_up(tb // 2, 8))
    return min(tb, batch)


@functools.partial(jax.jit, static_argnames=("block_batch",))
def player_embedding_forward(x, params, *, block_batch=4096):
    """Fused forward pass of PlayerEmbeddingModel.

    x:      [batch, input_dim] float32
    params: dict with w1 [input_dim,128], b1 [1,128],
                      w2 [128,64],        b2 [1,64],
                      w3 [64,emb],        b3 [1,emb]
    returns [batch, emb] float32
    """
    batch, input_dim = x.shape
    emb_dim = params["w3"].shape[1]

    tb = _choose_tb(batch, input_dim, emb_dim, block_batch)
    grid = (pl.cdiv(batch, tb),)

    w1 = params["w1"].astype(jnp.float32)
    w2 = params["w2"].astype(jnp.float32)
    w3 = params["w3"].astype(jnp.float32)
    b1 = params["b1"].astype(jnp.float32)
    b2 = params["b2"].astype(jnp.float32)
    b3 = params["b3"].astype(jnp.float32)

    full = lambda i: (0, 0)    # weights / biases: grid-invariant block
    tiled = lambda i: (i, 0)   # x / out: tiled over batch

    flops = 2 * batch * (input_dim * 128 + 128 * 64 + 64 * emb_dim)
    bytes_accessed = 4 * (x.size
                          + w1.size + w2.size + w3.size
                          + b1.size + b2.size + b3.size
                          + batch * emb_dim)

    out = pl.pallas_call(
        _mlp_kernel,
        out_shape=jax.ShapeDtypeStruct((batch, emb_dim), jnp.float32),
        grid_spec=pltpu.PrefetchScalarGridSpec(
            num_scalar_prefetch=0,
            grid=grid,
            in_specs=[
                pl.BlockSpec((tb, input_dim), tiled),     # x
                pl.BlockSpec((input_dim, 128), full),     # w1
                pl.BlockSpec((1, 128), full),             # b1
                pl.BlockSpec((128, 64), full),            # w2
                pl.BlockSpec((1, 64), full),              # b2
                pl.BlockSpec((64, emb_dim), full),        # w3
                pl.BlockSpec((1, emb_dim), full),         # b3
            ],
            out_specs=pl.BlockSpec((tb, emb_dim), tiled),
        ),
        compiler_params=pltpu.CompilerParams(
            dimension_semantics=("parallel",),
            vmem_limit_bytes=_VMEM_LIMIT,
        ),
        cost_estimate=pl.CostEstimate(
            flops=flops, transcendentals=0, bytes_accessed=bytes_accessed),
    )(x.astype(jnp.float32), w1, b1, w2, b2, w3, b3)

    return out


def init_params(key, input_dim, embedding_dim=32):
    """Deterministic synthetic init (Kaiming-uniform-like, like nn.Linear)."""
    def linear(key, fan_in, fan_out):
        kw, kb = jax.random.split(key)
        bound = 1.0 / jnp.sqrt(fan_in)
        w = jax.random.uniform(kw, (fan_in, fan_out), jnp.float32, -bound, bound)
        b = jax.random.uniform(kb, (1, fan_out), jnp.float32, -bound, bound)
        return w, b

    k1, k2, k3 = jax.random.split(key, 3)
    w1, b1 = linear(k1, input_dim, 128)
    w2, b2 = linear(k2, 128, 64)
    w3, b3 = linear(k3, 64, embedding_dim)
    return dict(w1=w1, b1=b1, w2=w2, b2=b2, w3=w3, b3=b3)


def reference_forward_f32(x, p):
    """Exact f32 math of the PyTorch module (eval mode)."""
    hi = jax.lax.Precision.HIGHEST
    h1 = jnp.maximum(jnp.dot(x, p["w1"], precision=hi) + p["b1"], 0.0)
    h2 = jnp.maximum(jnp.dot(h1, p["w2"], precision=hi) + p["b2"], 0.0)
    return jnp.dot(h2, p["w3"], precision=hi) + p["b3"]


if __name__ == "__main__":
    key = jax.random.PRNGKey(0)
    kx, kp = jax.random.split(key)

    # batch deliberately not a power of two / tile multiple to exercise the
    # partial-block path; small enough to run everywhere.
    batch, input_dim, embedding_dim = 500, 16, 32
    x = jax.random.normal(kx, (batch, input_dim), jnp.float32)
    params = init_params(kp, input_dim, embedding_dim)

    out = player_embedding_forward(x, params)
    out = jax.block_until_ready(out)
    assert out.shape == (batch, embedding_dim)

    # The kernel now uses f32 operands end-to-end, so it should track the
    # exact f32 module semantics closely.
    ref = reference_forward_f32(x, params)
    assert jnp.allclose(out, ref, atol=2e-2, rtol=2e-2), "mismatch vs f32 reference"

    print("KERNEL_OK")
</pallas_src>

<mosaic_0001>
module attributes {stable_mosaic.version = 11 : i64} {
  func.func @_mlp_kernel(%arg0: i32, %arg1: memref<500x16xf32, #tpu.memory_space<vmem>>, %arg2: memref<16x128xf32, #tpu.memory_space<vmem>>, %arg3: memref<1x128xf32, #tpu.memory_space<vmem>>, %arg4: memref<128x64xf32, #tpu.memory_space<vmem>>, %arg5: memref<1x64xf32, #tpu.memory_space<vmem>>, %arg6: memref<64x32xf32, #tpu.memory_space<vmem>>, %arg7: memref<1x32xf32, #tpu.memory_space<vmem>>, %arg8: memref<500x32xf32, #tpu.memory_space<vmem>>) attributes {dimension_semantics = [#tpu.dimension_semantics<parallel>], iteration_bounds = array<i64: 1>, scalar_prefetch = 0 : i64, scratch_operands = 0 : i64, tpu.core_type = #tpu.core_type<tc>, window_params = [{transform_indices = @transform_0, window_bounds = array<i64: 500, 16>}, {pipeline_mode = #tpu.pipeline_mode<synchronous>, transform_indices = @transform_1, window_bounds = array<i64: 16, 128>}, {pipeline_mode = #tpu.pipeline_mode<synchronous>, transform_indices = @transform_2, window_bounds = array<i64: 1, 128>}, {pipeline_mode = #tpu.pipeline_mode<synchronous>, transform_indices = @transform_3, window_bounds = array<i64: 128, 64>}, {pipeline_mode = #tpu.pipeline_mode<synchronous>, transform_indices = @transform_4, window_bounds = array<i64: 1, 64>}, {pipeline_mode = #tpu.pipeline_mode<synchronous>, transform_indices = @transform_5, window_bounds = array<i64: 64, 32>}, {pipeline_mode = #tpu.pipeline_mode<synchronous>, transform_indices = @transform_6, window_bounds = array<i64: 1, 32>}, {transform_indices = @transform_7, window_bounds = array<i64: 500, 32>}]} {
    %c0 = arith.constant 0 : index
    %c0_0 = arith.constant 0 : index
    %0 = vector.load %arg1[%c0, %c0_0] : memref<500x16xf32, #tpu.memory_space<vmem>>, vector<500x16xf32>
    %c0_1 = arith.constant 0 : index
    %c0_2 = arith.constant 0 : index
    %1 = vector.load %arg2[%c0_1, %c0_2] : memref<16x128xf32, #tpu.memory_space<vmem>>, vector<16x128xf32>
    %cst = arith.constant dense<0.000000e+00> : vector<500x128xf32>
    %2 = tpu.matmul %0, %1, %cst {dimension_numbers = #tpu.dot_dimension_numbers<[1], [0], [0], [1], [0, 0, 1, 1], [], []>} : vector<500x16xf32>, vector<16x128xf32>, vector<500x128xf32> -> vector<500x128xf32>
    %c0_3 = arith.constant 0 : index
    %c0_4 = arith.constant 0 : index
    %3 = vector.load %arg3[%c0_3, %c0_4] : memref<1x128xf32, #tpu.memory_space<vmem>>, vector<1x128xf32>
    %4 = vector.broadcast %3 : vector<1x128xf32> to vector<500x128xf32>
    %5 = arith.addf %2, %4 : vector<500x128xf32>
    %cst_5 = arith.constant 0.000000e+00 : f32
    %6 = vector.broadcast %cst_5 : f32 to vector<500x128xf32>
    %7 = arith.maximumf %5, %6 : vector<500x128xf32>
    %c0_6 = arith.constant 0 : index
    %c0_7 = arith.constant 0 : index
    %8 = vector.load %arg4[%c0_6, %c0_7] : memref<128x64xf32, #tpu.memory_space<vmem>>, vector<128x64xf32>
    %cst_8 = arith.constant dense<0.000000e+00> : vector<500x64xf32>
    %9 = tpu.matmul %7, %8, %cst_8 {dimension_numbers = #tpu.dot_dimension_numbers<[1], [0], [0], [1], [0, 0, 1, 1], [], []>} : vector<500x128xf32>, vector<128x64xf32>, vector<500x64xf32> -> vector<500x64xf32>
    %c0_9 = arith.constant 0 : index
    %c0_10 = arith.constant 0 : index
    %10 = vector.load %arg5[%c0_9, %c0_10] : memref<1x64xf32, #tpu.memory_space<vmem>>, vector<1x64xf32>
    %11 = vector.broadcast %10 : vector<1x64xf32> to vector<500x64xf32>
    %12 = arith.addf %9, %11 : vector<500x64xf32>
    %cst_11 = arith.constant 0.000000e+00 : f32
    %13 = vector.broadcast %cst_11 : f32 to vector<500x64xf32>
    %14 = arith.maximumf %12, %13 : vector<500x64xf32>
    %c0_12 = arith.constant 0 : index
    %c0_13 = arith.constant 0 : index
    %15 = vector.load %arg6[%c0_12, %c0_13] : memref<64x32xf32, #tpu.memory_space<vmem>>, vector<64x32xf32>
    %cst_14 = arith.constant dense<0.000000e+00> : vector<500x32xf32>
    %16 = tpu.matmul %14, %15, %cst_14 {dimension_numbers = #tpu.dot_dimension_numbers<[1], [0], [0], [1], [0, 0, 1, 1], [], []>} : vector<500x64xf32>, vector<64x32xf32>, vector<500x32xf32> -> vector<500x32xf32>
    %c0_15 = arith.constant 0 : index
    %c0_16 = arith.constant 0 : index
    %17 = vector.load %arg7[%c0_15, %c0_16] : memref<1x32xf32, #tpu.memory_space<vmem>>, vector<1x32xf32>
    %18 = vector.broadcast %17 : vector<1x32xf32> to vector<500x32xf32>
    %19 = arith.addf %16, %18 : vector<500x32xf32>
    %c0_17 = arith.constant 0 : index
    %c0_18 = arith.constant 0 : index
    %20 = vector.load %arg8[%c0_17, %c0_18] : memref<500x32xf32, #tpu.memory_space<vmem>>, vector<500x32xf32>
    tpu.vector_store %arg8[%c0_17, %c0_18], %19 {strides = array<i32>} : memref<500x32xf32, #tpu.memory_space<vmem>>, vector<500x32xf32>,
    return
  }
  func.func @transform_0(%arg0: i32) -> (i32, i32) {
    %c0_i32 = arith.constant 0 : i32
    %c0_i32_0 = arith.constant 0 : i32
    return %arg0, %c0_i32 : i32, i32
  }
  func.func @transform_1(%arg0: i32) -> (i32, i32) {
    %c0_i32 = arith.constant 0 : i32
    %c0_i32_0 = arith.constant 0 : i32
    %c0_i32_1 = arith.constant 0 : i32
    return %c0_i32, %c0_i32_0 : i32, i32
  }
  func.func @transform_2(%arg0: i32) -> (i32, i32) {
    %c0_i32 = arith.constant 0 : i32
    %c0_i32_0 = arith.constant 0 : i32
    %c0_i32_1 = arith.constant 0 : i32
    return %c0_i32, %c0_i32_0 : i32, i32
  }
  func.func @transform_3(%arg0: i32) -> (i32, i32) {
    %c0_i32 = arith.constant 0 : i32
    %c0_i32_0 = arith.constant 0 : i32
    %c0_i32_1 = arith.constant 0 : i32
    return %c0_i32, %c0_i32_0 : i32, i32
  }
  func.func @transform_4(%arg0: i32) -> (i32, i32) {
    %c0_i32 = arith.constant 0 : i32
    %c0_i32_0 = arith.constant 0 : i32
    %c0_i32_1 = arith.constant 0 : i32
    return %c0_i32, %c0_i32_0 : i32, i32
  }
  func.func @transform_5(%arg0: i32) -> (i32, i32) {
    %c0_i32 = arith.constant 0 : i32
    %c0_i32_0 = arith.constant 0 : i32
    %c0_i32_1 = arith.constant 0 : i32
    return %c0_i32, %c0_i32_0 : i32, i32
  }
  func.func @transform_6(%arg0: i32) -> (i32, i32) {
    %c0_i32 = arith.constant 0 : i32
    %c0_i32_0 = arith.constant 0 : i32
    %c0_i32_1 = arith.constant 0 : i32
    return %c0_i32, %c0_i32_0 : i32, i32
  }
  func.func @transform_7(%arg0: i32) -> (i32, i32) {
    %c0_i32 = arith.constant 0 : i32
    %c0_i32_0 = arith.constant 0 : i32
    return %arg0, %c0_i32 : i32, i32
  }
}

</mosaic_0001>

<llo_original>
// kernel: player_embedding_forward.1
$region0: #{player_embedding_forward.1}
  #allocation0 [shape = 'u32[]', space=smem, size = 0x4, offset = 0x4, fixed_abs, tag = 'smem constant byte address 0x4 - core index']
  #allocation1 [shape = 'u32[144,128]{1,0:T(1,128)}', space=vmem, size = 0x12000, scoped, tag = 'internal scratch']
  %s0 = inlined_call_operand.vmem [shape: f32[500,16], index: 0, kind: input, shape index: {}]
  %s1 = inlined_call_operand.vmem [shape: f32[16,128], index: 1, kind: input, shape index: {}]
  %s2 = inlined_call_operand.vmem [shape: f32[1,128], index: 2, kind: input, shape index: {}]
  %s3 = inlined_call_operand.vmem [shape: f32[128,64], index: 3, kind: input, shape index: {}]
  %s4 = inlined_call_operand.vmem [shape: f32[1,64], index: 4, kind: input, shape index: {}]
  %s5 = inlined_call_operand.vmem [shape: f32[64,32], index: 5, kind: input, shape index: {}]
  %s6 = inlined_call_operand.vmem [shape: f32[1,32], index: 6, kind: input, shape index: {}]
  %s7 = inlined_call_operand.vmem [shape: f32[500,32], index: 7, kind: output, shape index: {}]
  %s8 = sld [smem:[#allocation0]]
  $region38: #{player_embedding_forward.1} parent=0
    _
  %s10 = ssub.s32 1, %s8
  %s11 = scalar_select 0, %s10, %s8
  // Predicated region
  $region2: #{player_embedding_forward.1} parent=0 // pred_check
    _
  $region3: #{player_embedding_forward.1} parent=0 // pred_check_branch
    %13 = sbr.rel (0) target = $region5
  $region4: #{player_embedding_forward.1} parent=0 // pred_region
    _
  $region5: #{player_embedding_forward.1} parent=0 // pred_fallthru
    _
  // Predicated region
  $region6: #{player_embedding_forward.1} parent=0 // pred_check
    _
  $region7: #{player_embedding_forward.1} parent=0 // pred_check_branch
    %15 = sbr.rel (0) target = $region9
  $region8: #{player_embedding_forward.1} parent=0 // pred_region
    _
  $region9: #{player_embedding_forward.1} parent=0 // pred_fallthru
    _
  // Predicated region
  $region10: #{player_embedding_forward.1} parent=0 // pred_check
    _
  $region11: #{player_embedding_forward.1} parent=0 // pred_check_branch
    %17 = sbr.rel (0) target = $region13
  $region12: #{player_embedding_forward.1} parent=0 // pred_region
    _
  $region13: #{player_embedding_forward.1} parent=0 // pred_fallthru
    _
  // Predicated region
  $region14: #{player_embedding_forward.1} parent=0 // pred_check
    _
  $region15: #{player_embedding_forward.1} parent=0 // pred_check_branch
    %19 = sbr.rel (0) target = $region17
  $region16: #{player_embedding_forward.1} parent=0 // pred_region
    _
  $region17: #{player_embedding_forward.1} parent=0 // pred_fallthru
    _
  // Predicated region
  $region18: #{player_embedding_forward.1} parent=0 // pred_check
    _
  $region19: #{player_embedding_forward.1} parent=0 // pred_check_branch
    %21 = sbr.rel (0) target = $region21
  $region20: #{player_embedding_forward.1} parent=0 // pred_region
    _
  $region21: #{player_embedding_forward.1} parent=0 // pred_fallthru
    _
  // Predicated region
  $region22: #{player_embedding_forward.1} parent=0 // pred_check
    _
  $region23: #{player_embedding_forward.1} parent=0 // pred_check_branch
    %23 = sbr.rel (0) target = $region25
  $region24: #{player_embedding_forward.1} parent=0 // pred_region
    _
  $region25: #{player_embedding_forward.1} parent=0 // pred_fallthru
    _
  // Predicated region
  $region26: #{player_embedding_forward.1} parent=0 // pred_check
    _
  $region27: #{player_embedding_forward.1} parent=0 // pred_check_branch
    %25 = sbr.rel (0) target = $region29
  $region28: #{player_embedding_forward.1} parent=0 // pred_region
    _
  $region29: #{player_embedding_forward.1} parent=0 // pred_fallthru
    _
  %v26 = vld [vmem:[%s0] sm:$0xff]
  %v27 = vld [vmem:[%s0 + $0x8] sm:$0xff]
  %v28 = vld [vmem:[%s0 + $0x10] sm:$0xff]
  %v29 = vld [vmem:[%s0 + $0x18] sm:$0xff]
  %v30 = vld [vmem:[%s0 + $0x20] sm:$0xff]
  %v31 = vld [vmem:[%s0 + $0x28] sm:$0xff]
  %v32 = vld [vmem:[%s0 + $0x30] sm:$0xff]
  %v33 = vld [vmem:[%s0 + $0x38] sm:$0xff]
  %v34 = vld [vmem:[%s0 + $0x40] sm:$0xff]
  %v35 = vld [vmem:[%s0 + $0x48] sm:$0xff]
  %v36 = vld [vmem:[%s0 + $0x50] sm:$0xff]
  %v37 = vld [vmem:[%s0 + $0x58] sm:$0xff]
  %v38 = vld [vmem:[%s0 + $0x60] sm:$0xff]
  %v39 = vld [vmem:[%s0 + $0x68] sm:$0xff]
  %v40 = vld [vmem:[%s0 + $0x70] sm:$0xff]
  %v41 = vld [vmem:[%s0 + $0x78] sm:$0xff]
  %v42 = vld [vmem:[%s0 + $0x80] sm:$0xff]
  %v43 = vld [vmem:[%s0 + $0x88] sm:$0xff]
  %v44 = vld [vmem:[%s0 + $0x90] sm:$0xff]
  %v45 = vld [vmem:[%s0 + $0x98] sm:$0xff]
  %v46 = vld [vmem:[%s0 + $0xa0] sm:$0xff]
  %v47 = vld [vmem:[%s0 + $0xa8] sm:$0xff]
  %v48 = vld [vmem:[%s0 + $0xb0] sm:$0xff]
  %v49 = vld [vmem:[%s0 + $0xb8] sm:$0xff]
  %v50 = vld [vmem:[%s0 + $0xc0] sm:$0xff]
  %v51 = vld [vmem:[%s0 + $0xc8] sm:$0xff]
  %v52 = vld [vmem:[%s0 + $0xd0] sm:$0xff]
  %v53 = vld [vmem:[%s0 + $0xd8] sm:$0xff]
  %v54 = vld [vmem:[%s0 + $0xe0] sm:$0xff]
  %v55 = vld [vmem:[%s0 + $0xe8] sm:$0xff]
  %v56 = vld [vmem:[%s0 + $0xf0] sm:$0xff]
  %v57 = vld [vmem:[%s0 + $0xf8] sm:$0xff]
  %v58 = vld [vmem:[%s0 + $0x100] sm:$0xff]
  %v59 = vld [vmem:[%s0 + $0x108] sm:$0xff]
  %v60 = vld [vmem:[%s0 + $0x110] sm:$0xff]
  %v61 = vld [vmem:[%s0 + $0x118] sm:$0xff]
  %v62 = vld [vmem:[%s0 + $0x120] sm:$0xff]
  %v63 = vld [vmem:[%s0 + $0x128] sm:$0xff]
  %v64 = vld [vmem:[%s0 + $0x130] sm:$0xff]
  %v65 = vld [vmem:[%s0 + $0x138] sm:$0xff]
  %v66 = vld [vmem:[%s0 + $0x140] sm:$0xff]
  %v67 = vld [vmem:[%s0 + $0x148] sm:$0xff]
  %v68 = vld [vmem:[%s0 + $0x150] sm:$0xff]
  %v69 = vld [vmem:[%s0 + $0x158] sm:$0xff]
  %v70 = vld [vmem:[%s0 + $0x160] sm:$0xff]
  %v71 = vld [vmem:[%s0 + $0x168] sm:$0xff]
  %v72 = vld [vmem:[%s0 + $0x170] sm:$0xff]
  %v73 = vld [vmem:[%s0 + $0x178] sm:$0xff]
  %v74 = vld [vmem:[%s0 + $0x180] sm:$0xff]
  %v75 = vld [vmem:[%s0 + $0x188] sm:$0xff]
  %v76 = vld [vmem:[%s0 + $0x190] sm:$0xff]
  %v77 = vld [vmem:[%s0 + $0x198] sm:$0xff]
  %v78 = vld [vmem:[%s0 + $0x1a0] sm:$0xff]
  %v79 = vld [vmem:[%s0 + $0x1a8] sm:$0xff]
  %v80 = vld [vmem:[%s0 + $0x1b0] sm:$0xff]
  %v81 = vld [vmem:[%s0 + $0x1b8] sm:$0xff]
  %v82 = vld [vmem:[%s0 + $0x1c0] sm:$0xff]
  %v83 = vld [vmem:[%s0 + $0x1c8] sm:$0xff]
  %v84 = vld [vmem:[%s0 + $0x1d0] sm:$0xff]
  %v85 = vld [vmem:[%s0 + $0x1d8] sm:$0xff]
  %v86 = vld [vmem:[%s0 + $0x1e0] sm:$0xff]
  %v87 = vld [vmem:[%s0 + $0x1e8] sm:$0xff]
  %v88 = vld [vmem:[%s0 + $0x1f0] sm:$0xf]
  %v89 = vld [vmem:[%s1] sm:$0xff]
  %v90 = vld [vmem:[%s1 + $0x8] sm:$0xff]
  %v91 = vld [vmem:[%s2] sm:$0x1]
  %v93 = vlaneseq
  %v94 = vshrl.u32 %v93, 7
  %v95 = vsub.s32 0, %v94
  %v96 = vrot.slane %v91, %v95
  %vm98 = vcmask 130048
  %v100 = vsel %vm98, %v26, 0
  %v103 = vsel %vm98, %v27, 0
  %v106 = vsel %vm98, %v28, 0
  %v109 = vsel %vm98, %v29, 0
  %v112 = vsel %vm98, %v30, 0
  %v115 = vsel %vm98, %v31, 0
  %v118 = vsel %vm98, %v32, 0
  %v121 = vsel %vm98, %v33, 0
  %v124 = vsel %vm98, %v34, 0
  %v127 = vsel %vm98, %v35, 0
  %v130 = vsel %vm98, %v36, 0
  %v133 = vsel %vm98, %v37, 0
  %v136 = vsel %vm98, %v38, 0
  %v139 = vsel %vm98, %v39, 0
  %v142 = vsel %vm98, %v40, 0
  %v145 = vsel %vm98, %v41, 0
  %v148 = vsel %vm98, %v42, 0
  %v151 = vsel %vm98, %v43, 0
  %v154 = vsel %vm98, %v44, 0
  %v157 = vsel %vm98, %v45, 0
  %v160 = vsel %vm98, %v46, 0
  %v163 = vsel %vm98, %v47, 0
  %v166 = vsel %vm98, %v48, 0
  %v169 = vsel %vm98, %v49, 0
  %v172 = vsel %vm98, %v50, 0
  %v175 = vsel %vm98, %v51, 0
  %v178 = vsel %vm98, %v52, 0
  %v181 = vsel %vm98, %v53, 0
  %v184 = vsel %vm98, %v54, 0
  %v187 = vsel %vm98, %v55, 0
  %v190 = vsel %vm98, %v56, 0
  %v193 = vsel %vm98, %v57, 0
  %v196 = vsel %vm98, %v58, 0
  %v199 = vsel %vm98, %v59, 0
  %v202 = vsel %vm98, %v60, 0
  %v205 = vsel %vm98, %v61, 0
  %v208 = vsel %vm98, %v62, 0
  %v211 = vsel %vm98, %v63, 0
  %v214 = vsel %vm98, %v64, 0
  %v217 = vsel %vm98, %v65, 0
  %v220 = vsel %vm98, %v66, 0
  %v223 = vsel %vm98, %v67, 0
  %v226 = vsel %vm98, %v68, 0
  %v229 = vsel %vm98, %v69, 0
  %v232 = vsel %vm98, %v70, 0
  %v235 = vsel %vm98, %v71, 0
  %v238 = vsel %vm98, %v72, 0
  %v241 = vsel %vm98, %v73, 0
  %v244 = vsel %vm98, %v74, 0
  %v247 = vsel %vm98, %v75, 0
  %v250 = vsel %vm98, %v76, 0
  %v253 = vsel %vm98, %v77, 0
  %v256 = vsel %vm98, %v78, 0
  %v259 = vsel %vm98, %v79, 0
  %v262 = vsel %vm98, %v80, 0
  %v265 = vsel %vm98, %v81, 0
  %v268 = vsel %vm98, %v82, 0
  %v271 = vsel %vm98, %v83, 0
  %v274 = vsel %vm98, %v84, 0
  %v277 = vsel %vm98, %v85, 0
  %v280 = vsel %vm98, %v86, 0
  %v283 = vsel %vm98, %v87, 0
  %v286 = vsel %vm98, %v88, 0
  %288 = vmatprep.subr.mxu0 0.0
  %289 = vmatpush1.msra.mxu0 0.0
  %290 = vmatprep.subr.mxu0 0.0
  %291 = vmatpush1.msra.mxu0 0.0
  %292 = vmatprep.subr.mxu0 0.0
  %293 = vmatpush1.msra.mxu0 0.0
  %294 = vmatprep.subr.mxu0 0.0
  %295 = vmatpush1.msra.mxu0 0.0
  %296 = vmatprep.subr.mxu0 0.0
  %297 = vmatpush1.msra.mxu0 0.0
  %298 = vmatprep.subr.mxu0 0.0
  %299 = vmatpush1.msra.mxu0 0.0
  %300 = vmatprep.subr.mxu0 0.0
  %301 = vmatpush1.msra.mxu0 0.0
  %302 = vmatprep.subr.mxu0 0.0
  %303 = vmatpush1.msra.mxu0 0.0
  %304 = vmatprep.subr.mxu0 0.0
  %305 = vmatpush1.msra.mxu0 0.0
  %306 = vmatprep.subr.mxu0 0.0
  %307 = vmatpush1.msra.mxu0 0.0
  %308 = vmatprep.subr.mxu0 0.0
  %309 = vmatpush1.msra.mxu0 0.0
  %310 = vmatprep.subr.mxu0 0.0
  %311 = vmatpush1.msra.mxu0 0.0
  %312 = vmatprep.subr.mxu0 0.0
  %313 = vmatpush1.msra.mxu0 0.0
  %314 = vmatprep.subr.mxu0 0.0
  %315 = vmatpush1.msra.mxu0 0.0
  %316 = vmatprep.subr.mxu0 0.0
  %317 = vmatpush1.msra.mxu0 %v90
  %318 = vmatprep.subr.mxu0 0.0
  %319 = vmatpush1.msra.mxu0 %v89
  %320 = vmatprep.subr.mxu0 0.0
  %321 = vmatpush2.msra.mxu0 0.0
  %322 = vmatprep.subr.mxu0 0.0
  %323 = vmatpush2.msra.mxu0 0.0
  %324 = vmatprep.subr.mxu0 0.0
  %325 = vmatpush2.msra.mxu0 0.0
  %326 = vmatprep.subr.mxu0 0.0
  %327 = vmatpush2.msra.mxu0 0.0
  %328 = vmatprep.subr.mxu0 0.0
  %329 = vmatpush2.msra.mxu0 0.0
  %330 = vmatprep.subr.mxu0 0.0
  %331 = vmatpush2.msra.mxu0 0.0
  %332 = vmatprep.subr.mxu0 0.0
  %333 = vmatpush2.msra.mxu0 0.0
  %334 = vmatprep.subr.mxu0 0.0
  %335 = vmatpush2.msra.mxu0 0.0
  %336 = vmatprep.subr.mxu0 0.0
  %337 = vmatpush2.msra.mxu0 0.0
  %338 = vmatprep.subr.mxu0 0.0
  %339 = vmatpush2.msra.mxu0 0.0
  %340 = vmatprep.subr.mxu0 0.0
  %341 = vmatpush2.msra.mxu0 0.0
  %342 = vmatprep.subr.mxu0 0.0
  %343 = vmatpush2.msra.mxu0 0.0
  %344 = vmatprep.subr.mxu0 0.0
  %345 = vmatpush2.msra.mxu0 0.0
  %346 = vmatprep.subr.mxu0 0.0
  %347 = vmatpush2.msra.mxu0 0.0
  %348 = vmatprep.subr.mxu0 0.0
  %349 = vmatpush2.msra.mxu0 0.0
  %350 = vmatprep.subr.mxu0 0.0
  %351 = vmatpush2.msra.mxu0 0.0
  %352 = vmatprep.mubr.f32.mxu0 0.0
  %353 = vmatmul.mubr.f32.gmra.mxu0 %v100
  %v354 = vpop.f32.mrf.mxu0
  %v355 = vadd.f32 %v96, %v354
  %v356 = vpop.f32.mrf.mxu0
  %357 = vmatprep.mubr.f32.mxu0 0.0
  %358 = vmatmul.mubr.f32.gmra.mxu0 %v103
  %v359 = vpop.f32.mrf.mxu0
  %v360 = vadd.f32 %v96, %v359
  %v361 = vpop.f32.mrf.mxu0
  %362 = vmatprep.mubr.f32.mxu0 0.0
  %363 = vmatmul.mubr.f32.gmra.mxu0 %v106
  %v364 = vpop.f32.mrf.mxu0
  %v365 = vadd.f32 %v96, %v364
  %v366 = vpop.f32.mrf.mxu0
  %367 = vmatprep.mubr.f32.mxu0 0.0
  %368 = vmatmul.mubr.f32.gmra.mxu0 %v109
  %v369 = vpop.f32.mrf.mxu0
  %v370 = vadd.f32 %v96, %v369
  %v371 = vpop.f32.mrf.mxu0
  %372 = vmatprep.mubr.f32.mxu0 0.0
  %373 = vmatmul.mubr.f32.gmra.mxu0 %v112
  %v374 = vpop.f32.mrf.mxu0
  %v375 = vadd.f32 %v96, %v374
  %v376 = vpop.f32.mrf.mxu0
  %377 = vmatprep.mubr.f32.mxu0 0.0
  %378 = vmatmul.mubr.f32.gmra.mxu0 %v115
  %v379 = vpop.f32.mrf.mxu0
  %v380 = vadd.f32 %v96, %v379
  %v381 = vpop.f32.mrf.mxu0
  %382 = vmatprep.mubr.f32.mxu0 0.0
  %383 = vmatmul.mubr.f32.gmra.mxu0 %v118
  %v384 = vpop.f32.mrf.mxu0
  %v385 = vadd.f32 %v96, %v384
  %v386 = vpop.f32.mrf.mxu0
  %387 = vmatprep.mubr.f32.mxu0 0.0
  %388 = vmatmul.mubr.f32.gmra.mxu0 %v121
  %v389 = vpop.f32.mrf.mxu0
  %v390 = vadd.f32 %v96, %v389
  %v391 = vpop.f32.mrf.mxu0
  %392 = vmatprep.mubr.f32.mxu0 0.0
  %393 = vmatmul.mubr.f32.gmra.mxu0 %v124
  %v394 = vpop.f32.mrf.mxu0
  %v395 = vadd.f32 %v96, %v394
  %v396 = vpop.f32.mrf.mxu0
  %397 = vmatprep.mubr.f32.mxu0 0.0
  %398 = vmatmul.mubr.f32.gmra.mxu0 %v127
  %v399 = vpop.f32.mrf.mxu0
  %v400 = vadd.f32 %v96, %v399
  %v401 = vpop.f32.mrf.mxu0
  %402 = vmatprep.mubr.f32.mxu0 0.0
  %403 = vmatmul.mubr.f32.gmra.mxu0 %v130
  %v404 = vpop.f32.mrf.mxu0
  %v405 = vadd.f32 %v96, %v404
  %v406 = vpop.f32.mrf.mxu0
  %407 = vmatprep.mubr.f32.mxu0 0.0
  %408 = vmatmul.mubr.f32.gmra.mxu0 %v133
  %v409 = vpop.f32.mrf.mxu0
  %v410 = vadd.f32 %v96, %v409
  %v411 = vpop.f32.mrf.mxu0
  %412 = vmatprep.mubr.f32.mxu0 0.0
  %413 = vmatmul.mubr.f32.gmra.mxu0 %v136
  %v414 = vpop.f32.mrf.mxu0
  %v415 = vadd.f32 %v96, %v414
  %v416 = vpop.f32.mrf.mxu0
  %417 = vmatprep.mubr.f32.mxu0 0.0
  %418 = vmatmul.mubr.f32.gmra.mxu0 %v139
  %v419 = vpop.f32.mrf.mxu0
  %v420 = vadd.f32 %v96, %v419
  %v421 = vpop.f32.mrf.mxu0
  %422 = vmatprep.mubr.f32.mxu0 0.0
  %423 = vmatmul.mubr.f32.gmra.mxu0 %v142
  %v424 = vpop.f32.mrf.mxu0
  %v425 = vadd.f32 %v96, %v424
  %v426 = vpop.f32.mrf.mxu0
  %427 = vmatprep.mubr.f32.mxu0 0.0
  %428 = vmatmul.mubr.f32.gmra.mxu0 %v145
  %v429 = vpop.f32.mrf.mxu0
  %v430 = vadd.f32 %v96, %v429
  %v431 = vpop.f32.mrf.mxu0
  %432 = vmatprep.mubr.f32.mxu0 0.0
  %433 = vmatmul.mubr.f32.gmra.mxu0 %v148
  %v434 = vpop.f32.mrf.mxu0
  %v435 = vadd.f32 %v96, %v434
  %v436 = vpop.f32.mrf.mxu0
  %437 = vmatprep.mubr.f32.mxu0 0.0
  %438 = vmatmul.mubr.f32.gmra.mxu0 %v151
  %v439 = vpop.f32.mrf.mxu0
  %v440 = vadd.f32 %v96, %v439
  %v441 = vpop.f32.mrf.mxu0
  %442 = vmatprep.mubr.f32.mxu0 0.0
  %443 = vmatmul.mubr.f32.gmra.mxu0 %v154
  %v444 = vpop.f32.mrf.mxu0
  %v445 = vadd.f32 %v96, %v444
  %v446 = vpop.f32.mrf.mxu0
  %447 = vmatprep.mubr.f32.mxu0 0.0
  %448 = vmatmul.mubr.f32.gmra.mxu0 %v157
  %v449 = vpop.f32.mrf.mxu0
  %v450 = vadd.f32 %v96, %v449
  %v451 = vpop.f32.mrf.mxu0
  %452 = vmatprep.mubr.f32.mxu0 0.0
  %453 = vmatmul.mubr.f32.gmra.mxu0 %v160
  %v454 = vpop.f32.mrf.mxu0
  %v455 = vadd.f32 %v96, %v454
  %v456 = vpop.f32.mrf.mxu0
  %457 = vmatprep.mubr.f32.mxu0 0.0
  %458 = vmatmul.mubr.f32.gmra.mxu0 %v163
  %v459 = vpop.f32.mrf.mxu0
  %v460 = vadd.f32 %v96, %v459
  %v461 = vpop.f32.mrf.mxu0
  %462 = vmatprep.mubr.f32.mxu0 0.0
  %463 = vmatmul.mubr.f32.gmra.mxu0 %v166
  %v464 = vpop.f32.mrf.mxu0
  %v465 = vadd.f32 %v96, %v464
  %v466 = vpop.f32.mrf.mxu0
  %467 = vmatprep.mubr.f32.mxu0 0.0
  %468 = vmatmul.mubr.f32.gmra.mxu0 %v169
  %v469 = vpop.f32.mrf.mxu0
  %v470 = vadd.f32 %v96, %v469
  %v471 = vpop.f32.mrf.mxu0
  %472 = vmatprep.mubr.f32.mxu0 0.0
  %473 = vmatmul.mubr.f32.gmra.mxu0 %v172
  %v474 = vpop.f32.mrf.mxu0
  %v475 = vadd.f32 %v96, %v474
  %v476 = vpop.f32.mrf.mxu0
  %477 = vmatprep.mubr.f32.mxu0 0.0
  %478 = vmatmul.mubr.f32.gmra.mxu0 %v175
  %v479 = vpop.f32.mrf.mxu0
  %v480 = vadd.f32 %v96, %v479
  %v481 = vpop.f32.mrf.mxu0
  %482 = vmatprep.mubr.f32.mxu0 0.0
  %483 = vmatmul.mubr.f32.gmra.mxu0 %v178
  %v484 = vpop.f32.mrf.mxu0
  %v485 = vadd.f32 %v96, %v484
  %v486 = vpop.f32.mrf.mxu0
  %487 = vmatprep.mubr.f32.mxu0 0.0
  %488 = vmatmul.mubr.f32.gmra.mxu0 %v181
  %v489 = vpop.f32.mrf.mxu0
  %v490 = vadd.f32 %v96, %v489
  %v491 = vpop.f32.mrf.mxu0
  %492 = vmatprep.mubr.f32.mxu0 0.0
  %493 = vmatmul.mubr.f32.gmra.mxu0 %v184
  %v494 = vpop.f32.mrf.mxu0
  %v495 = vadd.f32 %v96, %v494
  %v496 = vpop.f32.mrf.mxu0
  %497 = vmatprep.mubr.f32.mxu0 0.0
  %498 = vmatmul.mubr.f32.gmra.mxu0 %v187
  %v499 = vpop.f32.mrf.mxu0
  %v500 = vadd.f32 %v96, %v499
  %v501 = vpop.f32.mrf.mxu0
  %502 = vmatprep.mubr.f32.mxu0 0.0
  %503 = vmatmul.mubr.f32.gmra.mxu0 %v190
  %v504 = vpop.f32.mrf.mxu0
  %v505 = vadd.f32 %v96, %v504
  %v506 = vpop.f32.mrf.mxu0
  %507 = vmatprep.mubr.f32.mxu0 0.0
  %508 = vmatmul.mubr.f32.gmra.mxu0 %v193
  %v509 = vpop.f32.mrf.mxu0
  %v510 = vadd.f32 %v96, %v509
  %v511 = vpop.f32.mrf.mxu0
  %512 = vmatprep.mubr.f32.mxu0 0.0
  %513 = vmatmul.mubr.f32.gmra.mxu0 %v196
  %v514 = vpop.f32.mrf.mxu0
  %v515 = vadd.f32 %v96, %v514
  %v516 = vpop.f32.mrf.mxu0
  %517 = vmatprep.mubr.f32.mxu0 0.0
  %518 = vmatmul.mubr.f32.gmra.mxu0 %v199
  %v519 = vpop.f32.mrf.mxu0
  %v520 = vadd.f32 %v96, %v519
  %v521 = vpop.f32.mrf.mxu0
  %522 = vmatprep.mubr.f32.mxu0 0.0
  %523 = vmatmul.mubr.f32.gmra.mxu0 %v202
  %v524 = vpop.f32.mrf.mxu0
  %v525 = vadd.f32 %v96, %v524
  %v526 = vpop.f32.mrf.mxu0
  %527 = vmatprep.mubr.f32.mxu0 0.0
  %528 = vmatmul.mubr.f32.gmra.mxu0 %v205
  %v529 = vpop.f32.mrf.mxu0
  %v530 = vadd.f32 %v96, %v529
  %v531 = vpop.f32.mrf.mxu0
  %532 = vmatprep.mubr.f32.mxu0 0.0
  %533 = vmatmul.mubr.f32.gmra.mxu0 %v208
  %v534 = vpop.f32.mrf.mxu0
  %v535 = vadd.f32 %v96, %v534
  %v536 = vpop.f32.mrf.mxu0
  %537 = vmatprep.mubr.f32.mxu0 0.0
  %538 = vmatmul.mubr.f32.gmra.mxu0 %v211
  %v539 = vpop.f32.mrf.mxu0
  %v540 = vadd.f32 %v96, %v539
  %v541 = vpop.f32.mrf.mxu0
  %542 = vmatprep.mubr.f32.mxu0 0.0
  %543 = vmatmul.mubr.f32.gmra.mxu0 %v214
  %v544 = vpop.f32.mrf.mxu0
  %v545 = vadd.f32 %v96, %v544
  %v546 = vpop.f32.mrf.mxu0
  %547 = vmatprep.mubr.f32.mxu0 0.0
  %548 = vmatmul.mubr.f32.gmra.mxu0 %v217
  %v549 = vpop.f32.mrf.mxu0
  %v550 = vadd.f32 %v96, %v549
  %v551 = vpop.f32.mrf.mxu0
  %552 = vmatprep.mubr.f32.mxu0 0.0
  %553 = vmatmul.mubr.f32.gmra.mxu0 %v220
  %v554 = vpop.f32.mrf.mxu0
  %v555 = vadd.f32 %v96, %v554
  %v556 = vpop.f32.mrf.mxu0
  %557 = vmatprep.mubr.f32.mxu0 0.0
  %558 = vmatmul.mubr.f32.gmra.mxu0 %v223
  %v559 = vpop.f32.mrf.mxu0
  %v560 = vadd.f32 %v96, %v559
  %v561 = vpop.f32.mrf.mxu0
  %562 = vmatprep.mubr.f32.mxu0 0.0
  %563 = vmatmul.mubr.f32.gmra.mxu0 %v226
  %v564 = vpop.f32.mrf.mxu0
  %v565 = vadd.f32 %v96, %v564
  %v566 = vpop.f32.mrf.mxu0
  %567 = vmatprep.mubr.f32.mxu0 0.0
  %568 = vmatmul.mubr.f32.gmra.mxu0 %v229
  %v569 = vpop.f32.mrf.mxu0
  %v570 = vadd.f32 %v96, %v569
  %v571 = vpop.f32.mrf.mxu0
  %572 = vmatprep.mubr.f32.mxu0 0.0
  %573 = vmatmul.mubr.f32.gmra.mxu0 %v232
  %v574 = vpop.f32.mrf.mxu0
  %v575 = vadd.f32 %v96, %v574
  %v576 = vpop.f32.mrf.mxu0
  %577 = vmatprep.mubr.f32.mxu0 0.0
  %578 = vmatmul.mubr.f32.gmra.mxu0 %v235
  %v579 = vpop.f32.mrf.mxu0
  %v580 = vadd.f32 %v96, %v579
  %v581 = vpop.f32.mrf.mxu0
  %582 = vmatprep.mubr.f32.mxu0 0.0
  %583 = vmatmul.mubr.f32.gmra.mxu0 %v238
  %v584 = vpop.f32.mrf.mxu0
  %v585 = vadd.f32 %v96, %v584
  %v586 = vpop.f32.mrf.mxu0
  %587 = vmatprep.mubr.f32.mxu0 0.0
  %588 = vmatmul.mubr.f32.gmra.mxu0 %v241
  %v589 = vpop.f32.mrf.mxu0
  %v590 = vadd.f32 %v96, %v589
  %v591 = vpop.f32.mrf.mxu0
  %592 = vmatprep.mubr.f32.mxu0 0.0
  %593 = vmatmul.mubr.f32.gmra.mxu0 %v244
  %v594 = vpop.f32.mrf.mxu0
  %v595 = vadd.f32 %v96, %v594
  %v596 = vpop.f32.mrf.mxu0
  %597 = vmatprep.mubr.f32.mxu0 0.0
  %598 = vmatmul.mubr.f32.gmra.mxu0 %v247
  %v599 = vpop.f32.mrf.mxu0
  %v600 = vadd.f32 %v96, %v599
  %v601 = vpop.f32.mrf.mxu0
  %602 = vmatprep.mubr.f32.mxu0 0.0
  %603 = vmatmul.mubr.f32.gmra.mxu0 %v250
  %v604 = vpop.f32.mrf.mxu0
  %v605 = vadd.f32 %v96, %v604
  %v606 = vpop.f32.mrf.mxu0
  %607 = vmatprep.mubr.f32.mxu0 0.0
  %608 = vmatmul.mubr.f32.gmra.mxu0 %v253
  %v609 = vpop.f32.mrf.mxu0
  %v610 = vadd.f32 %v96, %v609
  %v611 = vpop.f32.mrf.mxu0
  %612 = vmatprep.mubr.f32.mxu0 0.0
  %613 = vmatmul.mubr.f32.gmra.mxu0 %v256
  %v614 = vpop.f32.mrf.mxu0
  %v615 = vadd.f32 %v96, %v614
  %v616 = vpop.f32.mrf.mxu0
  %617 = vmatprep.mubr.f32.mxu0 0.0
  %618 = vmatmul.mubr.f32.gmra.mxu0 %v259
  %v619 = vpop.f32.mrf.mxu0
  %v620 = vadd.f32 %v96, %v619
  %v621 = vpop.f32.mrf.mxu0
  %622 = vmatprep.mubr.f32.mxu0 0.0
  %623 = vmatmul.mubr.f32.gmra.mxu0 %v262
  %v624 = vpop.f32.mrf.mxu0
  %v625 = vadd.f32 %v96, %v624
  %v626 = vpop.f32.mrf.mxu0
  %627 = vmatprep.mubr.f32.mxu0 0.0
  %628 = vmatmul.mubr.f32.gmra.mxu0 %v265
  %v629 = vpop.f32.mrf.mxu0
  %v630 = vadd.f32 %v96, %v629
  %v631 = vpop.f32.mrf.mxu0
  %632 = vmatprep.mubr.f32.mxu0 0.0
  %633 = vmatmul.mubr.f32.gmra.mxu0 %v268
  %v634 = vpop.f32.mrf.mxu0
  %v635 = vadd.f32 %v96, %v634
  %v636 = vpop.f32.mrf.mxu0
  %637 = vmatprep.mubr.f32.mxu0 0.0
  %638 = vmatmul.mubr.f32.gmra.mxu0 %v271
  %v639 = vpop.f32.mrf.mxu0
  %v640 = vadd.f32 %v96, %v639
  %v641 = vpop.f32.mrf.mxu0
  %642 = vmatprep.mubr.f32.mxu0 0.0
  %643 = vmatmul.mubr.f32.gmra.mxu0 %v274
  %v644 = vpop.f32.mrf.mxu0
  %v645 = vadd.f32 %v96, %v644
  %v646 = vpop.f32.mrf.mxu0
  %647 = vmatprep.mubr.f32.mxu0 0.0
  %648 = vmatmul.mubr.f32.gmra.mxu0 %v277
  %v649 = vpop.f32.mrf.mxu0
  %v650 = vadd.f32 %v96, %v649
  %v651 = vpop.f32.mrf.mxu0
  %652 = vmatprep.mubr.f32.mxu0 0.0
  %653 = vmatmul.mubr.f32.gmra.mxu0 %v280
  %v654 = vpop.f32.mrf.mxu0
  %v655 = vadd.f32 %v96, %v654
  %v656 = vpop.f32.mrf.mxu0
  %657 = vmatprep.mubr.f32.mxu0 0.0
  %658 = vmatmul.mubr.f32.gmra.mxu0 %v283
  %v659 = vpop.f32.mrf.mxu0
  %v660 = vadd.f32 %v96, %v659
  %v661 = vpop.f32.mrf.mxu0
  %662 = vmatprep.mubr.f32.mxu0 0.0
  %663 = vmatmul.mubr.f32.gmra.mxu0 %v286
  %v664 = vpop.f32.mrf.mxu0
  %v665 = vadd.f32 %v96, %v664
  %v666 = vpop.f32.mrf.mxu0
  %667 = vdwg.mxu0
  %v668 = vmax.f32 %v355, 0.0
  %v669 = vmax.f32 %v360, 0.0
  %v670 = vmax.f32 %v365, 0.0
  %v671 = vmax.f32 %v370, 0.0
  %v672 = vmax.f32 %v375, 0.0
  %v673 = vmax.f32 %v380, 0.0
  %v674 = vmax.f32 %v385, 0.0
  %v675 = vmax.f32 %v390, 0.0
  %v676 = vmax.f32 %v395, 0.0
  %v677 = vmax.f32 %v400, 0.0
  %v678 = vmax.f32 %v405, 0.0
  %v679 = vmax.f32 %v410, 0.0
  %v680 = vmax.f32 %v415, 0.0
  %v681 = vmax.f32 %v420, 0.0
  %v682 = vmax.f32 %v425, 0.0
  %v683 = vmax.f32 %v430, 0.0
  %v684 = vmax.f32 %v435, 0.0
  %v685 = vmax.f32 %v440, 0.0
  %v686 = vmax.f32 %v445, 0.0
  %v687 = vmax.f32 %v450, 0.0
  %v688 = vmax.f32 %v455, 0.0
  %v689 = vmax.f32 %v460, 0.0
  %v690 = vmax.f32 %v465, 0.0
  %v691 = vmax.f32 %v470, 0.0
  %v692 = vmax.f32 %v475, 0.0
  %v693 = vmax.f32 %v480, 0.0
  %v694 = vmax.f32 %v485, 0.0
  %v695 = vmax.f32 %v490, 0.0
  %v696 = vmax.f32 %v495, 0.0
  %v697 = vmax.f32 %v500, 0.0
  %v698 = vmax.f32 %v505, 0.0
  %v699 = vmax.f32 %v510, 0.0
  %v700 = vmax.f32 %v515, 0.0
  %v701 = vmax.f32 %v520, 0.0
  %v702 = vmax.f32 %v525, 0.0
  %v703 = vmax.f32 %v530, 0.0
  %v704 = vmax.f32 %v535, 0.0
  %v705 = vmax.f32 %v540, 0.0
  %v706 = vmax.f32 %v545, 0.0
  %v707 = vmax.f32 %v550, 0.0
  %v708 = vmax.f32 %v555, 0.0
  %v709 = vmax.f32 %v560, 0.0
  %v710 = vmax.f32 %v565, 0.0
  %v711 = vmax.f32 %v570, 0.0
  %v712 = vmax.f32 %v575, 0.0
  %v713 = vmax.f32 %v580, 0.0
  %v714 = vmax.f32 %v585, 0.0
  %v715 = vmax.f32 %v590, 0.0
  %v716 = vmax.f32 %v595, 0.0
  %v717 = vmax.f32 %v600, 0.0
  %v718 = vmax.f32 %v605, 0.0
  %v719 = vmax.f32 %v610, 0.0
  %v720 = vmax.f32 %v615, 0.0
  %v721 = vmax.f32 %v620, 0.0
  %v722 = vmax.f32 %v625, 0.0
  %v723 = vmax.f32 %v630, 0.0
  %v724 = vmax.f32 %v635, 0.0
  %v725 = vmax.f32 %v640, 0.0
  %v726 = vmax.f32 %v645, 0.0
  %v727 = vmax.f32 %v650, 0.0
  %v728 = vmax.f32 %v655, 0.0
  %v729 = vmax.f32 %v660, 0.0
  %v730 = vmax.f32 %v665, 0.0
  %v731 = vld [vmem:[%s3] sm:$0xff]
  %v732 = vld [vmem:[%s3 + $0x8] sm:$0xff]
  %v733 = vld [vmem:[%s3 + $0x10] sm:$0xff]
  %v734 = vld [vmem:[%s3 + $0x18] sm:$0xff]
  %v735 = vld [vmem:[%s3 + $0x20] sm:$0xff]
  %v736 = vld [vmem:[%s3 + $0x28] sm:$0xff]
  %v737 = vld [vmem:[%s3 + $0x30] sm:$0xff]
  %v738 = vld [vmem:[%s3 + $0x38] sm:$0xff]
  %v739 = vld [vmem:[%s3 + $0x40] sm:$0xff]
  %v740 = vld [vmem:[%s3 + $0x48] sm:$0xff]
  %v741 = vld [vmem:[%s3 + $0x50] sm:$0xff]
  %v742 = vld [vmem:[%s3 + $0x58] sm:$0xff]
  %v743 = vld [vmem:[%s3 + $0x60] sm:$0xff]
  %v744 = vld [vmem:[%s3 + $0x68] sm:$0xff]
  %v745 = vld [vmem:[%s3 + $0x70] sm:$0xff]
  %v746 = vld [vmem:[%s3 + $0x78] sm:$0xff]
  %v747 = vld [vmem:[%s4] sm:$0x1]
  %v749 = vlaneseq
  %v750 = vshrl.u32 %v749, 7
  %v751 = vsub.s32 0, %v750
  %v752 = vrot.slane %v747, %v751
  %754 = vmatprep.subr.mxu0 0.0
  %755 = vmatpush1.msra.mxu0 %v746
  %756 = vmatprep.subr.mxu0 0.0
  %757 = vmatpush1.msra.mxu0 %v745
  %758 = vmatprep.subr.mxu0 0.0
  %759 = vmatpush1.msra.mxu0 %v744
  %760 = vmatprep.subr.mxu0 0.0
  %761 = vmatpush1.msra.mxu0 %v743
  %762 = vmatprep.subr.mxu0 0.0
  %763 = vmatpush1.msra.mxu0 %v742
  %764 = vmatprep.subr.mxu0 0.0
  %765 = vmatpush1.msra.mxu0 %v741
  %766 = vmatprep.subr.mxu0 0.0
  %767 = vmatpush1.msra.mxu0 %v740
  %768 = vmatprep.subr.mxu0 0.0
  %769 = vmatpush1.msra.mxu0 %v739
  %770 = vmatprep.subr.mxu0 0.0
  %771 = vmatpush1.msra.mxu0 %v738
  %772 = vmatprep.subr.mxu0 0.0
  %773 = vmatpush1.msra.mxu0 %v737
  %774 = vmatprep.subr.mxu0 0.0
  %775 = vmatpush1.msra.mxu0 %v736
  %776 = vmatprep.subr.mxu0 0.0
  %777 = vmatpush1.msra.mxu0 %v735
  %778 = vmatprep.subr.mxu0 0.0
  %779 = vmatpush1.msra.mxu0 %v734
  %780 = vmatprep.subr.mxu0 0.0
  %781 = vmatpush1.msra.mxu0 %v733
  %782 = vmatprep.subr.mxu0 0.0
  %783 = vmatpush1.msra.mxu0 %v732
  %784 = vmatprep.subr.mxu0 0.0
  %785 = vmatpush1.msra.mxu0 %v731
  %786 = vmatprep.subr.mxu0 0.0
  %787 = vmatpush2.msra.mxu0 0.0
  %788 = vmatprep.subr.mxu0 0.0
  %789 = vmatpush2.msra.mxu0 0.0
  %790 = vmatprep.subr.mxu0 0.0
  %791 = vmatpush2.msra.mxu0 0.0
  %792 = vmatprep.subr.mxu0 0.0
  %793 = vmatpush2.msra.mxu0 0.0
  %794 = vmatprep.subr.mxu0 0.0
  %795 = vmatpush2.msra.mxu0 0.0
  %796 = vmatprep.subr.mxu0 0.0
  %797 = vmatpush2.msra.mxu0 0.0
  %798 = vmatprep.subr.mxu0 0.0
  %799 = vmatpush2.msra.mxu0 0.0
  %800 = vmatprep.subr.mxu0 0.0
  %801 = vmatpush2.msra.mxu0 0.0
  %802 = vmatprep.subr.mxu0 0.0
  %803 = vmatpush2.msra.mxu0 0.0
  %804 = vmatprep.subr.mxu0 0.0
  %805 = vmatpush2.msra.mxu0 0.0
  %806 = vmatprep.subr.mxu0 0.0
  %807 = vmatpush2.msra.mxu0 0.0
  %808 = vmatprep.subr.mxu0 0.0
  %809 = vmatpush2.msra.mxu0 0.0
  %810 = vmatprep.subr.mxu0 0.0
  %811 = vmatpush2.msra.mxu0 0.0
  %812 = vmatprep.subr.mxu0 0.0
  %813 = vmatpush2.msra.mxu0 0.0
  %814 = vmatprep.subr.mxu0 0.0
  %815 = vmatpush2.msra.mxu0 0.0
  %816 = vmatprep.subr.mxu0 0.0
  %817 = vmatpush2.msra.mxu0 0.0
  %818 = vmatprep.mubr.f32.mxu0 0.0
  %819 = vmatmul.mubr.f32.gmra.mxu0 %v668
  %v820 = vpop.f32.mrf.mxu0
  %v821 = vadd.f32 %v752, %v820
  %v822 = vpop.f32.mrf.mxu0
  %823 = vmatprep.mubr.f32.mxu0 0.0
  %824 = vmatmul.mubr.f32.gmra.mxu0 %v669
  %v825 = vpop.f32.mrf.mxu0
  %v826 = vadd.f32 %v752, %v825
  %v827 = vpop.f32.mrf.mxu0
  %828 = vmatprep.mubr.f32.mxu0 0.0
  %829 = vmatmul.mubr.f32.gmra.mxu0 %v670
  %v830 = vpop.f32.mrf.mxu0
  %v831 = vadd.f32 %v752, %v830
  %v832 = vpop.f32.mrf.mxu0
  %833 = vmatprep.mubr.f32.mxu0 0.0
  %834 = vmatmul.mubr.f32.gmra.mxu0 %v671
  %v835 = vpop.f32.mrf.mxu0
  %v836 = vadd.f32 %v752, %v835
  %v837 = vpop.f32.mrf.mxu0
  %838 = vmatprep.mubr.f32.mxu0 0.0
  %839 = vmatmul.mubr.f32.gmra.mxu0 %v672
  %v840 = vpop.f32.mrf.mxu0
  %v841 = vadd.f32 %v752, %v840
  %v842 = vpop.f32.mrf.mxu0
  %843 = vmatprep.mubr.f32.mxu0 0.0
  %844 = vmatmul.mubr.f32.gmra.mxu0 %v673
  %v845 = vpop.f32.mrf.mxu0
  %v846 = vadd.f32 %v752, %v845
  %v847 = vpop.f32.mrf.mxu0
  %848 = vmatprep.mubr.f32.mxu0 0.0
  %849 = vmatmul.mubr.f32.gmra.mxu0 %v674
  %v850 = vpop.f32.mrf.mxu0
  %v851 = vadd.f32 %v752, %v850
  %v852 = vpop.f32.mrf.mxu0
  %853 = vmatprep.mubr.f32.mxu0 0.0
  %854 = vmatmul.mubr.f32.gmra.mxu0 %v675
  %v855 = vpop.f32.mrf.mxu0
  %v856 = vadd.f32 %v752, %v855
  %v857 = vpop.f32.mrf.mxu0
  %858 = vmatprep.mubr.f32.mxu0 0.0
  %859 = vmatmul.mubr.f32.gmra.mxu0 %v676
  %v860 = vpop.f32.mrf.mxu0
  %v861 = vadd.f32 %v752, %v860
  %v862 = vpop.f32.mrf.mxu0
  %863 = vmatprep.mubr.f32.mxu0 0.0
  %864 = vmatmul.mubr.f32.gmra.mxu0 %v677
  %v865 = vpop.f32.mrf.mxu0
  %v866 = vadd.f32 %v752, %v865
  %v867 = vpop.f32.mrf.mxu0
  %868 = vmatprep.mubr.f32.mxu0 0.0
  %869 = vmatmul.mubr.f32.gmra.mxu0 %v678
  %v870 = vpop.f32.mrf.mxu0
  %v871 = vadd.f32 %v752, %v870
  %v872 = vpop.f32.mrf.mxu0
  %873 = vmatprep.mubr.f32.mxu0 0.0
  %874 = vmatmul.mubr.f32.gmra.mxu0 %v679
  %v875 = vpop.f32.mrf.mxu0
  %v876 = vadd.f32 %v752, %v875
  %v877 = vpop.f32.mrf.mxu0
  %878 = vmatprep.mubr.f32.mxu0 0.0
  %879 = vmatmul.mubr.f32.gmra.mxu0 %v680
  %v880 = vpop.f32.mrf.mxu0
  %v881 = vadd.f32 %v752, %v880
  %v882 = vpop.f32.mrf.mxu0
  %883 = vmatprep.mubr.f32.mxu0 0.0
  %884 = vmatmul.mubr.f32.gmra.mxu0 %v681
  %v885 = vpop.f32.mrf.mxu0
  %v886 = vadd.f32 %v752, %v885
  %v887 = vpop.f32.mrf.mxu0
  %888 = vmatprep.mubr.f32.mxu0 0.0
  %889 = vmatmul.mubr.f32.gmra.mxu0 %v682
  %v890 = vpop.f32.mrf.mxu0
  %v891 = vadd.f32 %v752, %v890
  %v892 = vpop.f32.mrf.mxu0
  %893 = vmatprep.mubr.f32.mxu0 0.0
  %894 = vmatmul.mubr.f32.gmra.mxu0 %v683
  %v895 = vpop.f32.mrf.mxu0
  %v896 = vadd.f32 %v752, %v895
  %v897 = vpop.f32.mrf.mxu0
  %898 = vmatprep.mubr.f32.mxu0 0.0
  %899 = vmatmul.mubr.f32.gmra.mxu0 %v684
  %v900 = vpop.f32.mrf.mxu0
  %v901 = vadd.f32 %v752, %v900
  %v902 = vpop.f32.mrf.mxu0
  %903 = vmatprep.mubr.f32.mxu0 0.0
  %904 = vmatmul.mubr.f32.gmra.mxu0 %v685
  %v905 = vpop.f32.mrf.mxu0
  %v906 = vadd.f32 %v752, %v905
  %v907 = vpop.f32.mrf.mxu0
  %908 = vmatprep.mubr.f32.mxu0 0.0
  %909 = vmatmul.mubr.f32.gmra.mxu0 %v686
  %v910 = vpop.f32.mrf.mxu0
  %v911 = vadd.f32 %v752, %v910
  %v912 = vpop.f32.mrf.mxu0
  %913 = vmatprep.mubr.f32.mxu0 0.0
  %914 = vmatmul.mubr.f32.gmra.mxu0 %v687
  %v915 = vpop.f32.mrf.mxu0
  %v916 = vadd.f32 %v752, %v915
  %v917 = vpop.f32.mrf.mxu0
  %918 = vmatprep.mubr.f32.mxu0 0.0
  %919 = vmatmul.mubr.f32.gmra.mxu0 %v688
  %v920 = vpop.f32.mrf.mxu0
  %v921 = vadd.f32 %v752, %v920
  %v922 = vpop.f32.mrf.mxu0
  %923 = vmatprep.mubr.f32.mxu0 0.0
  %924 = vmatmul.mubr.f32.gmra.mxu0 %v689
  %v925 = vpop.f32.mrf.mxu0
  %v926 = vadd.f32 %v752, %v925
  %v927 = vpop.f32.mrf.mxu0
  %928 = vmatprep.mubr.f32.mxu0 0.0
  %929 = vmatmul.mubr.f32.gmra.mxu0 %v690
  %v930 = vpop.f32.mrf.mxu0
  %v931 = vadd.f32 %v752, %v930
  %v932 = vpop.f32.mrf.mxu0
  %933 = vmatprep.mubr.f32.mxu0 0.0
  %934 = vmatmul.mubr.f32.gmra.mxu0 %v691
  %v935 = vpop.f32.mrf.mxu0
  %v936 = vadd.f32 %v752, %v935
  %v937 = vpop.f32.mrf.mxu0
  %938 = vmatprep.mubr.f32.mxu0 0.0
  %939 = vmatmul.mubr.f32.gmra.mxu0 %v692
  %v940 = vpop.f32.mrf.mxu0
  %v941 = vadd.f32 %v752, %v940
  %v942 = vpop.f32.mrf.mxu0
  %943 = vmatprep.mubr.f32.mxu0 0.0
  %944 = vmatmul.mubr.f32.gmra.mxu0 %v693
  %v945 = vpop.f32.mrf.mxu0
  %v946 = vadd.f32 %v752, %v945
  %v947 = vpop.f32.mrf.mxu0
  %948 = vmatprep.mubr.f32.mxu0 0.0
  %949 = vmatmul.mubr.f32.gmra.mxu0 %v694
  %v950 = vpop.f32.mrf.mxu0
  %v951 = vadd.f32 %v752, %v950
  %v952 = vpop.f32.mrf.mxu0
  %953 = vmatprep.mubr.f32.mxu0 0.0
  %954 = vmatmul.mubr.f32.gmra.mxu0 %v695
  %v955 = vpop.f32.mrf.mxu0
  %v956 = vadd.f32 %v752, %v955
  %v957 = vpop.f32.mrf.mxu0
  %958 = vmatprep.mubr.f32.mxu0 0.0
  %959 = vmatmul.mubr.f32.gmra.mxu0 %v696
  %v960 = vpop.f32.mrf.mxu0
  %v961 = vadd.f32 %v752, %v960
  %v962 = vpop.f32.mrf.mxu0
  %963 = vmatprep.mubr.f32.mxu0 0.0
  %964 = vmatmul.mubr.f32.gmra.mxu0 %v697
  %v965 = vpop.f32.mrf.mxu0
  %v966 = vadd.f32 %v752, %v965
  %v967 = vpop.f32.mrf.mxu0
  %968 = vmatprep.mubr.f32.mxu0 0.0
  %969 = vmatmul.mubr.f32.gmra.mxu0 %v698
  %v970 = vpop.f32.mrf.mxu0
  %v971 = vadd.f32 %v752, %v970
  %v972 = vpop.f32.mrf.mxu0
  %973 = vmatprep.mubr.f32.mxu0 0.0
  %974 = vmatmul.mubr.f32.gmra.mxu0 %v699
  %v975 = vpop.f32.mrf.mxu0
  %v976 = vadd.f32 %v752, %v975
  %v977 = vpop.f32.mrf.mxu0
  %978 = vmatprep.mubr.f32.mxu0 0.0
  %979 = vmatmul.mubr.f32.gmra.mxu0 %v700
  %v980 = vpop.f32.mrf.mxu0
  %v981 = vadd.f32 %v752, %v980
  %v982 = vpop.f32.mrf.mxu0
  %983 = vmatprep.mubr.f32.mxu0 0.0
  %984 = vmatmul.mubr.f32.gmra.mxu0 %v701
  %v985 = vpop.f32.mrf.mxu0
  %v986 = vadd.f32 %v752, %v985
  %v987 = vpop.f32.mrf.mxu0
  %988 = vmatprep.mubr.f32.mxu0 0.0
  %989 = vmatmul.mubr.f32.gmra.mxu0 %v702
  %v990 = vpop.f32.mrf.mxu0
  %v991 = vadd.f32 %v752, %v990
  %v992 = vpop.f32.mrf.mxu0
  %993 = vmatprep.mubr.f32.mxu0 0.0
  %994 = vmatmul.mubr.f32.gmra.mxu0 %v703
  %v995 = vpop.f32.mrf.mxu0
  %v996 = vadd.f32 %v752, %v995
  %v997 = vpop.f32.mrf.mxu0
  %998 = vmatprep.mubr.f32.mxu0 0.0
  %999 = vmatmul.mubr.f32.gmra.mxu0 %v704
  %v1000 = vpop.f32.mrf.mxu0
  %v1001 = vadd.f32 %v752, %v1000
  %v1002 = vpop.f32.mrf.mxu0
  %1003 = vmatprep.mubr.f32.mxu0 0.0
  %1004 = vmatmul.mubr.f32.gmra.mxu0 %v705
  %v1005 = vpop.f32.mrf.mxu0
  %v1006 = vadd.f32 %v752, %v1005
  %v1007 = vpop.f32.mrf.mxu0
  %1008 = vmatprep.mubr.f32.mxu0 0.0
  %1009 = vmatmul.mubr.f32.gmra.mxu0 %v706
  %v1010 = vpop.f32.mrf.mxu0
  %v1011 = vadd.f32 %v752, %v1010
  %v1012 = vpop.f32.mrf.mxu0
  %1013 = vmatprep.mubr.f32.mxu0 0.0
  %1014 = vmatmul.mubr.f32.gmra.mxu0 %v707
  %v1015 = vpop.f32.mrf.mxu0
  %v1016 = vadd.f32 %v752, %v1015
  %v1017 = vpop.f32.mrf.mxu0
  %1018 = vmatprep.mubr.f32.mxu0 0.0
  %1019 = vmatmul.mubr.f32.gmra.mxu0 %v708
  %v1020 = vpop.f32.mrf.mxu0
  %v1021 = vadd.f32 %v752, %v1020
  %v1022 = vpop.f32.mrf.mxu0
  %1023 = vmatprep.mubr.f32.mxu0 0.0
  %1024 = vmatmul.mubr.f32.gmra.mxu0 %v709
  %v1025 = vpop.f32.mrf.mxu0
  %v1026 = vadd.f32 %v752, %v1025
  %v1027 = vpop.f32.mrf.mxu0
  %1028 = vmatprep.mubr.f32.mxu0 0.0
  %1029 = vmatmul.mubr.f32.gmra.mxu0 %v710
  %v1030 = vpop.f32.mrf.mxu0
  %v1031 = vadd.f32 %v752, %v1030
  %v1032 = vpop.f32.mrf.mxu0
  %1033 = vmatprep.mubr.f32.mxu0 0.0
  %1034 = vmatmul.mubr.f32.gmra.mxu0 %v711
  %v1035 = vpop.f32.mrf.mxu0
  %v1036 = vadd.f32 %v752, %v1035
  %v1037 = vpop.f32.mrf.mxu0
  %1038 = vmatprep.mubr.f32.mxu0 0.0
  %1039 = vmatmul.mubr.f32.gmra.mxu0 %v712
  %v1040 = vpop.f32.mrf.mxu0
  %v1041 = vadd.f32 %v752, %v1040
  %v1042 = vpop.f32.mrf.mxu0
  %1043 = vmatprep.mubr.f32.mxu0 0.0
  %1044 = vmatmul.mubr.f32.gmra.mxu0 %v713
  %v1045 = vpop.f32.mrf.mxu0
  %v1046 = vadd.f32 %v752, %v1045
  %v1047 = vpop.f32.mrf.mxu0
  %1048 = vmatprep.mubr.f32.mxu0 0.0
  %1049 = vmatmul.mubr.f32.gmra.mxu0 %v714
  %v1050 = vpop.f32.mrf.mxu0
  %v1051 = vadd.f32 %v752, %v1050
  %v1052 = vpop.f32.mrf.mxu0
  %1053 = vmatprep.mubr.f32.mxu0 0.0
  %1054 = vmatmul.mubr.f32.gmra.mxu0 %v715
  %v1055 = vpop.f32.mrf.mxu0
  %v1056 = vadd.f32 %v752, %v1055
  %v1057 = vpop.f32.mrf.mxu0
  %1058 = vmatprep.mubr.f32.mxu0 0.0
  %1059 = vmatmul.mubr.f32.gmra.mxu0 %v716
  %v1060 = vpop.f32.mrf.mxu0
  %v1061 = vadd.f32 %v752, %v1060
  %v1062 = vpop.f32.mrf.mxu0
  %1063 = vmatprep.mubr.f32.mxu0 0.0
  %1064 = vmatmul.mubr.f32.gmra.mxu0 %v717
  %v1065 = vpop.f32.mrf.mxu0
  %v1066 = vadd.f32 %v752, %v1065
  %v1067 = vpop.f32.mrf.mxu0
  %1068 = vmatprep.mubr.f32.mxu0 0.0
  %1069 = vmatmul.mubr.f32.gmra.mxu0 %v718
  %v1070 = vpop.f32.mrf.mxu0
  %v1071 = vadd.f32 %v752, %v1070
  %v1072 = vpop.f32.mrf.mxu0
  %1073 = vmatprep.mubr.f32.mxu0 0.0
  %1074 = vmatmul.mubr.f32.gmra.mxu0 %v719
  %v1075 = vpop.f32.mrf.mxu0
  %v1076 = vadd.f32 %v752, %v1075
  %v1077 = vpop.f32.mrf.mxu0
  %1078 = vmatprep.mubr.f32.mxu0 0.0
  %1079 = vmatmul.mubr.f32.gmra.mxu0 %v720
  %v1080 = vpop.f32.mrf.mxu0
  %v1081 = vadd.f32 %v752, %v1080
  %v1082 = vpop.f32.mrf.mxu0
  %1083 = vmatprep.mubr.f32.mxu0 0.0
  %1084 = vmatmul.mubr.f32.gmra.mxu0 %v721
  %v1085 = vpop.f32.mrf.mxu0
  %v1086 = vadd.f32 %v752, %v1085
  %v1087 = vpop.f32.mrf.mxu0
  %1088 = vmatprep.mubr.f32.mxu0 0.0
  %1089 = vmatmul.mubr.f32.gmra.mxu0 %v722
  %v1090 = vpop.f32.mrf.mxu0
  %v1091 = vadd.f32 %v752, %v1090
  %v1092 = vpop.f32.mrf.mxu0
  %1093 = vmatprep.mubr.f32.mxu0 0.0
  %1094 = vmatmul.mubr.f32.gmra.mxu0 %v723
  %v1095 = vpop.f32.mrf.mxu0
  %v1096 = vadd.f32 %v752, %v1095
  %v1097 = vpop.f32.mrf.mxu0
  %1098 = vmatprep.mubr.f32.mxu0 0.0
  %1099 = vmatmul.mubr.f32.gmra.mxu0 %v724
  %v1100 = vpop.f32.mrf.mxu0
  %v1101 = vadd.f32 %v752, %v1100
  %v1102 = vpop.f32.mrf.mxu0
  %1103 = vmatprep.mubr.f32.mxu0 0.0
  %1104 = vmatmul.mubr.f32.gmra.mxu0 %v725
  %v1105 = vpop.f32.mrf.mxu0
  %v1106 = vadd.f32 %v752, %v1105
  %v1107 = vpop.f32.mrf.mxu0
  %1108 = vmatprep.mubr.f32.mxu0 0.0
  %1109 = vmatmul.mubr.f32.gmra.mxu0 %v726
  %v1110 = vpop.f32.mrf.mxu0
  %v1111 = vadd.f32 %v752, %v1110
  %v1112 = vpop.f32.mrf.mxu0
  %1113 = vmatprep.mubr.f32.mxu0 0.0
  %1114 = vmatmul.mubr.f32.gmra.mxu0 %v727
  %v1115 = vpop.f32.mrf.mxu0
  %v1116 = vadd.f32 %v752, %v1115
  %v1117 = vpop.f32.mrf.mxu0
  %1118 = vmatprep.mubr.f32.mxu0 0.0
  %1119 = vmatmul.mubr.f32.gmra.mxu0 %v728
  %v1120 = vpop.f32.mrf.mxu0
  %v1121 = vadd.f32 %v752, %v1120
  %v1122 = vpop.f32.mrf.mxu0
  %1123 = vmatprep.mubr.f32.mxu0 0.0
  %1124 = vmatmul.mubr.f32.gmra.mxu0 %v729
  %v1125 = vpop.f32.mrf.mxu0
  %v1126 = vadd.f32 %v752, %v1125
  %v1127 = vpop.f32.mrf.mxu0
  %1128 = vmatprep.mubr.f32.mxu0 0.0
  %1129 = vmatmul.mubr.f32.gmra.mxu0 %v730
  %v1130 = vpop.f32.mrf.mxu0
  %v1131 = vadd.f32 %v752, %v1130
  %v1132 = vpop.f32.mrf.mxu0
  %1133 = vdwg.mxu0
  %v1134 = vmax.f32 %v821, 0.0
  %v1135 = vmax.f32 %v826, 0.0
  %v1136 = vmax.f32 %v831, 0.0
  %v1137 = vmax.f32 %v836, 0.0
  %v1138 = vmax.f32 %v841, 0.0
  %v1139 = vmax.f32 %v846, 0.0
  %v1140 = vmax.f32 %v851, 0.0
  %v1141 = vmax.f32 %v856, 0.0
  %v1142 = vmax.f32 %v861, 0.0
  %v1143 = vmax.f32 %v866, 0.0
  %v1144 = vmax.f32 %v871, 0.0
  %v1145 = vmax.f32 %v876, 0.0
  %v1146 = vmax.f32 %v881, 0.0
  %v1147 = vmax.f32 %v886, 0.0
  %v1148 = vmax.f32 %v891, 0.0
  %v1149 = vmax.f32 %v896, 0.0
  %v1150 = vmax.f32 %v901, 0.0
  %v1151 = vmax.f32 %v906, 0.0
  %v1152 = vmax.f32 %v911, 0.0
  %v1153 = vmax.f32 %v916, 0.0
  %v1154 = vmax.f32 %v921, 0.0
  %v1155 = vmax.f32 %v926, 0.0
  %v1156 = vmax.f32 %v931, 0.0
  %v1157 = vmax.f32 %v936, 0.0
  %v1158 = vmax.f32 %v941, 0.0
  %v1159 = vmax.f32 %v946, 0.0
  %v1160 = vmax.f32 %v951, 0.0
  %v1161 = vmax.f32 %v956, 0.0
  %v1162 = vmax.f32 %v961, 0.0
  %v1163 = vmax.f32 %v966, 0.0
  %v1164 = vmax.f32 %v971, 0.0
  %v1165 = vmax.f32 %v976, 0.0
  %v1166 = vmax.f32 %v981, 0.0
  %v1167 = vmax.f32 %v986, 0.0
  %v1168 = vmax.f32 %v991, 0.0
  %v1169 = vmax.f32 %v996, 0.0
  %v1170 = vmax.f32 %v1001, 0.0
  %v1171 = vmax.f32 %v1006, 0.0
  %v1172 = vmax.f32 %v1011, 0.0
  %v1173 = vmax.f32 %v1016, 0.0
  %v1174 = vmax.f32 %v1021, 0.0
  %v1175 = vmax.f32 %v1026, 0.0
  %v1176 = vmax.f32 %v1031, 0.0
  %v1177 = vmax.f32 %v1036, 0.0
  %v1178 = vmax.f32 %v1041, 0.0
  %v1179 = vmax.f32 %v1046, 0.0
  %v1180 = vmax.f32 %v1051, 0.0
  %v1181 = vmax.f32 %v1056, 0.0
  %v1182 = vmax.f32 %v1061, 0.0
  %v1183 = vmax.f32 %v1066, 0.0
  %v1184 = vmax.f32 %v1071, 0.0
  %v1185 = vmax.f32 %v1076, 0.0
  %v1186 = vmax.f32 %v1081, 0.0
  %v1187 = vmax.f32 %v1086, 0.0
  %v1188 = vmax.f32 %v1091, 0.0
  %v1189 = vmax.f32 %v1096, 0.0
  %v1190 = vmax.f32 %v1101, 0.0
  %v1191 = vmax.f32 %v1106, 0.0
  %v1192 = vmax.f32 %v1111, 0.0
  %v1193 = vmax.f32 %v1116, 0.0
  %v1194 = vmax.f32 %v1121, 0.0
  %v1195 = vmax.f32 %v1126, 0.0
  %v1196 = vmax.f32 %v1131, 0.0
  %v1197 = vld [vmem:[%s5] sm:$0xff]
  %v1198 = vld [vmem:[%s5 + $0x8] sm:$0xff]
  %v1199 = vld [vmem:[%s5 + $0x10] sm:$0xff]
  %v1200 = vld [vmem:[%s5 + $0x18] sm:$0xff]
  %v1201 = vld [vmem:[%s5 + $0x20] sm:$0xff]
  %v1202 = vld [vmem:[%s5 + $0x28] sm:$0xff]
  %v1203 = vld [vmem:[%s5 + $0x30] sm:$0xff]
  %v1204 = vld [vmem:[%s5 + $0x38] sm:$0xff]
  %v1205 = vld [vmem:[%s6] sm:$0x1]
  %v1207 = vlaneseq
  %v1208 = vshrl.u32 %v1207, 7
  %v1209 = vsub.s32 0, %v1208
  %v1210 = vrot.slane %v1205, %v1209
  %vm1212 = vcmask 523264
  %v1214 = vsel %vm1212, %v1134, 0
  %v1217 = vsel %vm1212, %v1135, 0
  %v1220 = vsel %vm1212, %v1136, 0
  %v1223 = vsel %vm1212, %v1137, 0
  %v1226 = vsel %vm1212, %v1138, 0
  %v1229 = vsel %vm1212, %v1139, 0
  %v1232 = vsel %vm1212, %v1140, 0
  %v1235 = vsel %vm1212, %v1141, 0
  %v1238 = vsel %vm1212, %v1142, 0
  %v1241 = vsel %vm1212, %v1143, 0
  %v1244 = vsel %vm1212, %v1144, 0
  %v1247 = vsel %vm1212, %v1145, 0
  %v1250 = vsel %vm1212, %v1146, 0
  %v1253 = vsel %vm1212, %v1147, 0
  %v1256 = vsel %vm1212, %v1148, 0
  %v1259 = vsel %vm1212, %v1149, 0
  %v1262 = vsel %vm1212, %v1150, 0
  %v1265 = vsel %vm1212, %v1151, 0
  %v1268 = vsel %vm1212, %v1152, 0
  %v1271 = vsel %vm1212, %v1153, 0
  %v1274 = vsel %vm1212, %v1154, 0
  %v1277 = vsel %vm1212, %v1155, 0
  %v1280 = vsel %vm1212, %v1156, 0
  %v1283 = vsel %vm1212, %v1157, 0
  %v1286 = vsel %vm1212, %v1158, 0
  %v1289 = vsel %vm1212, %v1159, 0
  %v1292 = vsel %vm1212, %v1160, 0
  %v1295 = vsel %vm1212, %v1161, 0
  %v1298 = vsel %vm1212, %v1162, 0
  %v1301 = vsel %vm1212, %v1163, 0
  %v1304 = vsel %vm1212, %v1164, 0
  %v1307 = vsel %vm1212, %v1165, 0
  %v1310 = vsel %vm1212, %v1166, 0
  %v1313 = vsel %vm1212, %v1167, 0
  %v1316 = vsel %vm1212, %v1168, 0
  %v1319 = vsel %vm1212, %v1169, 0
  %v1322 = vsel %vm1212, %v1170, 0
  %v1325 = vsel %vm1212, %v1171, 0
  %v1328 = vsel %vm1212, %v1172, 0
  %v1331 = vsel %vm1212, %v1173, 0
  %v1334 = vsel %vm1212, %v1174, 0
  %v1337 = vsel %vm1212, %v1175, 0
  %v1340 = vsel %vm1212, %v1176, 0
  %v1343 = vsel %vm1212, %v1177, 0
  %v1346 = vsel %vm1212, %v1178, 0
  %v1349 = vsel %vm1212, %v1179, 0
  %v1352 = vsel %vm1212, %v1180, 0
  %v1355 = vsel %vm1212, %v1181, 0
  %v1358 = vsel %vm1212, %v1182, 0
  %v1361 = vsel %vm1212, %v1183, 0
  %v1364 = vsel %vm1212, %v1184, 0
  %v1367 = vsel %vm1212, %v1185, 0
  %v1370 = vsel %vm1212, %v1186, 0
  %v1373 = vsel %vm1212, %v1187, 0
  %v1376 = vsel %vm1212, %v1188, 0
  %v1379 = vsel %vm1212, %v1189, 0
  %v1382 = vsel %vm1212, %v1190, 0
  %v1385 = vsel %vm1212, %v1191, 0
  %v1388 = vsel %vm1212, %v1192, 0
  %v1391 = vsel %vm1212, %v1193, 0
  %v1394 = vsel %vm1212, %v1194, 0
  %v1397 = vsel %vm1212, %v1195, 0
  %v1400 = vsel %vm1212, %v1196, 0
  %1402 = vmatprep.subr.mxu0 0.0
  %1403 = vmatpush1.msra.mxu0 0.0
  %1404 = vmatprep.subr.mxu0 0.0
  %1405 = vmatpush1.msra.mxu0 0.0
  %1406 = vmatprep.subr.mxu0 0.0
  %1407 = vmatpush1.msra.mxu0 0.0
  %1408 = vmatprep.subr.mxu0 0.0
  %1409 = vmatpush1.msra.mxu0 0.0
  %1410 = vmatprep.subr.mxu0 0.0
  %1411 = vmatpush1.msra.mxu0 0.0
  %1412 = vmatprep.subr.mxu0 0.0
  %1413 = vmatpush1.msra.mxu0 0.0
  %1414 = vmatprep.subr.mxu0 0.0
  %1415 = vmatpush1.msra.mxu0 0.0
  %1416 = vmatprep.subr.mxu0 0.0
  %1417 = vmatpush1.msra.mxu0 0.0
  %1418 = vmatprep.subr.mxu0 0.0
  %1419 = vmatpush1.msra.mxu0 %v1204
  %1420 = vmatprep.subr.mxu0 0.0
  %1421 = vmatpush1.msra.mxu0 %v1203
  %1422 = vmatprep.subr.mxu0 0.0
  %1423 = vmatpush1.msra.mxu0 %v1202
  %1424 = vmatprep.subr.mxu0 0.0
  %1425 = vmatpush1.msra.mxu0 %v1201
  %1426 = vmatprep.subr.mxu0 0.0
  %1427 = vmatpush1.msra.mxu0 %v1200
  %1428 = vmatprep.subr.mxu0 0.0
  %1429 = vmatpush1.msra.mxu0 %v1199
  %1430 = vmatprep.subr.mxu0 0.0
  %1431 = vmatpush1.msra.mxu0 %v1198
  %1432 = vmatprep.subr.mxu0 0.0
  %1433 = vmatpush1.msra.mxu0 %v1197
  %1434 = vmatprep.subr.mxu0 0.0
  %1435 = vmatpush2.msra.mxu0 0.0
  %1436 = vmatprep.subr.mxu0 0.0
  %1437 = vmatpush2.msra.mxu0 0.0
  %1438 = vmatprep.subr.mxu0 0.0
  %1439 = vmatpush2.msra.mxu0 0.0
  %1440 = vmatprep.subr.mxu0 0.0
  %1441 = vmatpush2.msra.mxu0 0.0
  %1442 = vmatprep.subr.mxu0 0.0
  %1443 = vmatpush2.msra.mxu0 0.0
  %1444 = vmatprep.subr.mxu0 0.0
  %1445 = vmatpush2.msra.mxu0 0.0
  %1446 = vmatprep.subr.mxu0 0.0
  %1447 = vmatpush2.msra.mxu0 0.0
  %1448 = vmatprep.subr.mxu0 0.0
  %1449 = vmatpush2.msra.mxu0 0.0
  %1450 = vmatprep.subr.mxu0 0.0
  %1451 = vmatpush2.msra.mxu0 0.0
  %1452 = vmatprep.subr.mxu0 0.0
  %1453 = vmatpush2.msra.mxu0 0.0
  %1454 = vmatprep.subr.mxu0 0.0
  %1455 = vmatpush2.msra.mxu0 0.0
  %1456 = vmatprep.subr.mxu0 0.0
  %1457 = vmatpush2.msra.mxu0 0.0
  %1458 = vmatprep.subr.mxu0 0.0
  %1459 = vmatpush2.msra.mxu0 0.0
  %1460 = vmatprep.subr.mxu0 0.0
  %1461 = vmatpush2.msra.mxu0 0.0
  %1462 = vmatprep.subr.mxu0 0.0
  %1463 = vmatpush2.msra.mxu0 0.0
  %1464 = vmatprep.subr.mxu0 0.0
  %1465 = vmatpush2.msra.mxu0 0.0
  %1466 = vmatprep.mubr.f32.mxu0 0.0
  %1467 = vmatmul.mubr.f32.gmra.mxu0 %v1214
  %v1468 = vpop.f32.mrf.mxu0
  %v1469 = vadd.f32 %v1210, %v1468
  %v1470 = vpop.f32.mrf.mxu0
  %1471 = vmatprep.mubr.f32.mxu0 0.0
  %1472 = vmatmul.mubr.f32.gmra.mxu0 %v1217
  %v1473 = vpop.f32.mrf.mxu0
  %v1474 = vadd.f32 %v1210, %v1473
  %v1475 = vpop.f32.mrf.mxu0
  %1476 = vmatprep.mubr.f32.mxu0 0.0
  %1477 = vmatmul.mubr.f32.gmra.mxu0 %v1220
  %v1478 = vpop.f32.mrf.mxu0
  %v1479 = vadd.f32 %v1210, %v1478
  %v1480 = vpop.f32.mrf.mxu0
  %1481 = vmatprep.mubr.f32.mxu0 0.0
  %1482 = vmatmul.mubr.f32.gmra.mxu0 %v1223
  %v1483 = vpop.f32.mrf.mxu0
  %v1484 = vadd.f32 %v1210, %v1483
  %v1485 = vpop.f32.mrf.mxu0
  %1486 = vmatprep.mubr.f32.mxu0 0.0
  %1487 = vmatmul.mubr.f32.gmra.mxu0 %v1226
  %v1488 = vpop.f32.mrf.mxu0
  %v1489 = vadd.f32 %v1210, %v1488
  %v1490 = vpop.f32.mrf.mxu0
  %1491 = vmatprep.mubr.f32.mxu0 0.0
  %1492 = vmatmul.mubr.f32.gmra.mxu0 %v1229
  %v1493 = vpop.f32.mrf.mxu0
  %v1494 = vadd.f32 %v1210, %v1493
  %v1495 = vpop.f32.mrf.mxu0
  %1496 = vmatprep.mubr.f32.mxu0 0.0
  %1497 = vmatmul.mubr.f32.gmra.mxu0 %v1232
  %v1498 = vpop.f32.mrf.mxu0
  %v1499 = vadd.f32 %v1210, %v1498
  %v1500 = vpop.f32.mrf.mxu0
  %1501 = vmatprep.mubr.f32.mxu0 0.0
  %1502 = vmatmul.mubr.f32.gmra.mxu0 %v1235
  %v1503 = vpop.f32.mrf.mxu0
  %v1504 = vadd.f32 %v1210, %v1503
  %v1505 = vpop.f32.mrf.mxu0
  %1506 = vmatprep.mubr.f32.mxu0 0.0
  %1507 = vmatmul.mubr.f32.gmra.mxu0 %v1238
  %v1508 = vpop.f32.mrf.mxu0
  %v1509 = vadd.f32 %v1210, %v1508
  %v1510 = vpop.f32.mrf.mxu0
  %1511 = vmatprep.mubr.f32.mxu0 0.0
  %1512 = vmatmul.mubr.f32.gmra.mxu0 %v1241
  %v1513 = vpop.f32.mrf.mxu0
  %v1514 = vadd.f32 %v1210, %v1513
  %v1515 = vpop.f32.mrf.mxu0
  %1516 = vmatprep.mubr.f32.mxu0 0.0
  %1517 = vmatmul.mubr.f32.gmra.mxu0 %v1244
  %v1518 = vpop.f32.mrf.mxu0
  %v1519 = vadd.f32 %v1210, %v1518
  %v1520 = vpop.f32.mrf.mxu0
  %1521 = vmatprep.mubr.f32.mxu0 0.0
  %1522 = vmatmul.mubr.f32.gmra.mxu0 %v1247
  %v1523 = vpop.f32.mrf.mxu0
  %v1524 = vadd.f32 %v1210, %v1523
  %v1525 = vpop.f32.mrf.mxu0
  %1526 = vmatprep.mubr.f32.mxu0 0.0
  %1527 = vmatmul.mubr.f32.gmra.mxu0 %v1250
  %v1528 = vpop.f32.mrf.mxu0
  %v1529 = vadd.f32 %v1210, %v1528
  %v1530 = vpop.f32.mrf.mxu0
  %1531 = vmatprep.mubr.f32.mxu0 0.0
  %1532 = vmatmul.mubr.f32.gmra.mxu0 %v1253
  %v1533 = vpop.f32.mrf.mxu0
  %v1534 = vadd.f32 %v1210, %v1533
  %v1535 = vpop.f32.mrf.mxu0
  %1536 = vmatprep.mubr.f32.mxu0 0.0
  %1537 = vmatmul.mubr.f32.gmra.mxu0 %v1256
  %v1538 = vpop.f32.mrf.mxu0
  %v1539 = vadd.f32 %v1210, %v1538
  %v1540 = vpop.f32.mrf.mxu0
  %1541 = vmatprep.mubr.f32.mxu0 0.0
  %1542 = vmatmul.mubr.f32.gmra.mxu0 %v1259
  %v1543 = vpop.f32.mrf.mxu0
  %v1544 = vadd.f32 %v1210, %v1543
  %v1545 = vpop.f32.mrf.mxu0
  %1546 = vmatprep.mubr.f32.mxu0 0.0
  %1547 = vmatmul.mubr.f32.gmra.mxu0 %v1262
  %v1548 = vpop.f32.mrf.mxu0
  %v1549 = vadd.f32 %v1210, %v1548
  %v1550 = vpop.f32.mrf.mxu0
  %1551 = vmatprep.mubr.f32.mxu0 0.0
  %1552 = vmatmul.mubr.f32.gmra.mxu0 %v1265
  %v1553 = vpop.f32.mrf.mxu0
  %v1554 = vadd.f32 %v1210, %v1553
  %v1555 = vpop.f32.mrf.mxu0
  %1556 = vmatprep.mubr.f32.mxu0 0.0
  %1557 = vmatmul.mubr.f32.gmra.mxu0 %v1268
  %v1558 = vpop.f32.mrf.mxu0
  %v1559 = vadd.f32 %v1210, %v1558
  %v1560 = vpop.f32.mrf.mxu0
  %1561 = vmatprep.mubr.f32.mxu0 0.0
  %1562 = vmatmul.mubr.f32.gmra.mxu0 %v1271
  %v1563 = vpop.f32.mrf.mxu0
  %v1564 = vadd.f32 %v1210, %v1563
  %v1565 = vpop.f32.mrf.mxu0
  %1566 = vmatprep.mubr.f32.mxu0 0.0
  %1567 = vmatmul.mubr.f32.gmra.mxu0 %v1274
  %v1568 = vpop.f32.mrf.mxu0
  %v1569 = vadd.f32 %v1210, %v1568
  %v1570 = vpop.f32.mrf.mxu0
  %1571 = vmatprep.mubr.f32.mxu0 0.0
  %1572 = vmatmul.mubr.f32.gmra.mxu0 %v1277
  %v1573 = vpop.f32.mrf.mxu0
  %v1574 = vadd.f32 %v1210, %v1573
  %v1575 = vpop.f32.mrf.mxu0
  %1576 = vmatprep.mubr.f32.mxu0 0.0
  %1577 = vmatmul.mubr.f32.gmra.mxu0 %v1280
  %v1578 = vpop.f32.mrf.mxu0
  %v1579 = vadd.f32 %v1210, %v1578
  %v1580 = vpop.f32.mrf.mxu0
  %1581 = vmatprep.mubr.f32.mxu0 0.0
  %1582 = vmatmul.mubr.f32.gmra.mxu0 %v1283
  %v1583 = vpop.f32.mrf.mxu0
  %v1584 = vadd.f32 %v1210, %v1583
  %v1585 = vpop.f32.mrf.mxu0
  %1586 = vmatprep.mubr.f32.mxu0 0.0
  %1587 = vmatmul.mubr.f32.gmra.mxu0 %v1286
  %v1588 = vpop.f32.mrf.mxu0
  %v1589 = vadd.f32 %v1210, %v1588
  %v1590 = vpop.f32.mrf.mxu0
  %1591 = vmatprep.mubr.f32.mxu0 0.0
  %1592 = vmatmul.mubr.f32.gmra.mxu0 %v1289
  %v1593 = vpop.f32.mrf.mxu0
  %v1594 = vadd.f32 %v1210, %v1593
  %v1595 = vpop.f32.mrf.mxu0
  %1596 = vmatprep.mubr.f32.mxu0 0.0
  %1597 = vmatmul.mubr.f32.gmra.mxu0 %v1292
  %v1598 = vpop.f32.mrf.mxu0
  %v1599 = vadd.f32 %v1210, %v1598
  %v1600 = vpop.f32.mrf.mxu0
  %1601 = vmatprep.mubr.f32.mxu0 0.0
  %1602 = vmatmul.mubr.f32.gmra.mxu0 %v1295
  %v1603 = vpop.f32.mrf.mxu0
  %v1604 = vadd.f32 %v1210, %v1603
  %v1605 = vpop.f32.mrf.mxu0
  %1606 = vmatprep.mubr.f32.mxu0 0.0
  %1607 = vmatmul.mubr.f32.gmra.mxu0 %v1298
  %v1608 = vpop.f32.mrf.mxu0
  %v1609 = vadd.f32 %v1210, %v1608
  %v1610 = vpop.f32.mrf.mxu0
  %1611 = vmatprep.mubr.f32.mxu0 0.0
  %1612 = vmatmul.mubr.f32.gmra.mxu0 %v1301
  %v1613 = vpop.f32.mrf.mxu0
  %v1614 = vadd.f32 %v1210, %v1613
  %v1615 = vpop.f32.mrf.mxu0
  %1616 = vmatprep.mubr.f32.mxu0 0.0
  %1617 = vmatmul.mubr.f32.gmra.mxu0 %v1304
  %v1618 = vpop.f32.mrf.mxu0
  %v1619 = vadd.f32 %v1210, %v1618
  %v1620 = vpop.f32.mrf.mxu0
  %1621 = vmatprep.mubr.f32.mxu0 0.0
  %1622 = vmatmul.mubr.f32.gmra.mxu0 %v1307
  %v1623 = vpop.f32.mrf.mxu0
  %v1624 = vadd.f32 %v1210, %v1623
  %v1625 = vpop.f32.mrf.mxu0
  %1626 = vmatprep.mubr.f32.mxu0 0.0
  %1627 = vmatmul.mubr.f32.gmra.mxu0 %v1310
  %v1628 = vpop.f32.mrf.mxu0
  %v1629 = vadd.f32 %v1210, %v1628
  %v1630 = vpop.f32.mrf.mxu0
  %1631 = vmatprep.mubr.f32.mxu0 0.0
  %1632 = vmatmul.mubr.f32.gmra.mxu0 %v1313
  %v1633 = vpop.f32.mrf.mxu0
  %v1634 = vadd.f32 %v1210, %v1633
  %v1635 = vpop.f32.mrf.mxu0
  %1636 = vmatprep.mubr.f32.mxu0 0.0
  %1637 = vmatmul.mubr.f32.gmra.mxu0 %v1316
  %v1638 = vpop.f32.mrf.mxu0
  %v1639 = vadd.f32 %v1210, %v1638
  %v1640 = vpop.f32.mrf.mxu0
  %1641 = vmatprep.mubr.f32.mxu0 0.0
  %1642 = vmatmul.mubr.f32.gmra.mxu0 %v1319
  %v1643 = vpop.f32.mrf.mxu0
  %v1644 = vadd.f32 %v1210, %v1643
  %v1645 = vpop.f32.mrf.mxu0
  %1646 = vmatprep.mubr.f32.mxu0 0.0
  %1647 = vmatmul.mubr.f32.gmra.mxu0 %v1322
  %v1648 = vpop.f32.mrf.mxu0
  %v1649 = vadd.f32 %v1210, %v1648
  %v1650 = vpop.f32.mrf.mxu0
  %1651 = vmatprep.mubr.f32.mxu0 0.0
  %1652 = vmatmul.mubr.f32.gmra.mxu0 %v1325
  %v1653 = vpop.f32.mrf.mxu0
  %v1654 = vadd.f32 %v1210, %v1653
  %v1655 = vpop.f32.mrf.mxu0
  %1656 = vmatprep.mubr.f32.mxu0 0.0
  %1657 = vmatmul.mubr.f32.gmra.mxu0 %v1328
  %v1658 = vpop.f32.mrf.mxu0
  %v1659 = vadd.f32 %v1210, %v1658
  %v1660 = vpop.f32.mrf.mxu0
  %1661 = vmatprep.mubr.f32.mxu0 0.0
  %1662 = vmatmul.mubr.f32.gmra.mxu0 %v1331
  %v1663 = vpop.f32.mrf.mxu0
  %v1664 = vadd.f32 %v1210, %v1663
  %v1665 = vpop.f32.mrf.mxu0
  %1666 = vmatprep.mubr.f32.mxu0 0.0
  %1667 = vmatmul.mubr.f32.gmra.mxu0 %v1334
  %v1668 = vpop.f32.mrf.mxu0
  %v1669 = vadd.f32 %v1210, %v1668
  %v1670 = vpop.f32.mrf.mxu0
  %1671 = vmatprep.mubr.f32.mxu0 0.0
  %1672 = vmatmul.mubr.f32.gmra.mxu0 %v1337
  %v1673 = vpop.f32.mrf.mxu0
  %v1674 = vadd.f32 %v1210, %v1673
  %v1675 = vpop.f32.mrf.mxu0
  %1676 = vmatprep.mubr.f32.mxu0 0.0
  %1677 = vmatmul.mubr.f32.gmra.mxu0 %v1340
  %v1678 = vpop.f32.mrf.mxu0
  %v1679 = vadd.f32 %v1210, %v1678
  %v1680 = vpop.f32.mrf.mxu0
  %1681 = vmatprep.mubr.f32.mxu0 0.0
  %1682 = vmatmul.mubr.f32.gmra.mxu0 %v1343
  %v1683 = vpop.f32.mrf.mxu0
  %v1684 = vadd.f32 %v1210, %v1683
  %v1685 = vpop.f32.mrf.mxu0
  %1686 = vmatprep.mubr.f32.mxu0 0.0
  %1687 = vmatmul.mubr.f32.gmra.mxu0 %v1346
  %v1688 = vpop.f32.mrf.mxu0
  %v1689 = vadd.f32 %v1210, %v1688
  %v1690 = vpop.f32.mrf.mxu0
  %1691 = vmatprep.mubr.f32.mxu0 0.0
  %1692 = vmatmul.mubr.f32.gmra.mxu0 %v1349
  %v1693 = vpop.f32.mrf.mxu0
  %v1694 = vadd.f32 %v1210, %v1693
  %v1695 = vpop.f32.mrf.mxu0
  %1696 = vmatprep.mubr.f32.mxu0 0.0
  %1697 = vmatmul.mubr.f32.gmra.mxu0 %v1352
  %v1698 = vpop.f32.mrf.mxu0
  %v1699 = vadd.f32 %v1210, %v1698
  %v1700 = vpop.f32.mrf.mxu0
  %1701 = vmatprep.mubr.f32.mxu0 0.0
  %1702 = vmatmul.mubr.f32.gmra.mxu0 %v1355
  %v1703 = vpop.f32.mrf.mxu0
  %v1704 = vadd.f32 %v1210, %v1703
  %v1705 = vpop.f32.mrf.mxu0
  %1706 = vmatprep.mubr.f32.mxu0 0.0
  %1707 = vmatmul.mubr.f32.gmra.mxu0 %v1358
  %v1708 = vpop.f32.mrf.mxu0
  %v1709 = vadd.f32 %v1210, %v1708
  %v1710 = vpop.f32.mrf.mxu0
  %1711 = vmatprep.mubr.f32.mxu0 0.0
  %1712 = vmatmul.mubr.f32.gmra.mxu0 %v1361
  %v1713 = vpop.f32.mrf.mxu0
  %v1714 = vadd.f32 %v1210, %v1713
  %v1715 = vpop.f32.mrf.mxu0
  %1716 = vmatprep.mubr.f32.mxu0 0.0
  %1717 = vmatmul.mubr.f32.gmra.mxu0 %v1364
  %v1718 = vpop.f32.mrf.mxu0
  %v1719 = vadd.f32 %v1210, %v1718
  %v1720 = vpop.f32.mrf.mxu0
  %1721 = vmatprep.mubr.f32.mxu0 0.0
  %1722 = vmatmul.mubr.f32.gmra.mxu0 %v1367
  %v1723 = vpop.f32.mrf.mxu0
  %v1724 = vadd.f32 %v1210, %v1723
  %v1725 = vpop.f32.mrf.mxu0
  %1726 = vmatprep.mubr.f32.mxu0 0.0
  %1727 = vmatmul.mubr.f32.gmra.mxu0 %v1370
  %v1728 = vpop.f32.mrf.mxu0
  %v1729 = vadd.f32 %v1210, %v1728
  %v1730 = vpop.f32.mrf.mxu0
  %1731 = vmatprep.mubr.f32.mxu0 0.0
  %1732 = vmatmul.mubr.f32.gmra.mxu0 %v1373
  %v1733 = vpop.f32.mrf.mxu0
  %v1734 = vadd.f32 %v1210, %v1733
  %v1735 = vpop.f32.mrf.mxu0
  %1736 = vmatprep.mubr.f32.mxu0 0.0
  %1737 = vmatmul.mubr.f32.gmra.mxu0 %v1376
  %v1738 = vpop.f32.mrf.mxu0
  %v1739 = vadd.f32 %v1210, %v1738
  %v1740 = vpop.f32.mrf.mxu0
  %1741 = vmatprep.mubr.f32.mxu0 0.0
  %1742 = vmatmul.mubr.f32.gmra.mxu0 %v1379
  %v1743 = vpop.f32.mrf.mxu0
  %v1744 = vadd.f32 %v1210, %v1743
  %v1745 = vpop.f32.mrf.mxu0
  %1746 = vmatprep.mubr.f32.mxu0 0.0
  %1747 = vmatmul.mubr.f32.gmra.mxu0 %v1382
  %v1748 = vpop.f32.mrf.mxu0
  %v1749 = vadd.f32 %v1210, %v1748
  %v1750 = vpop.f32.mrf.mxu0
  %1751 = vmatprep.mubr.f32.mxu0 0.0
  %1752 = vmatmul.mubr.f32.gmra.mxu0 %v1385
  %v1753 = vpop.f32.mrf.mxu0
  %v1754 = vadd.f32 %v1210, %v1753
  %v1755 = vpop.f32.mrf.mxu0
  %1756 = vmatprep.mubr.f32.mxu0 0.0
  %1757 = vmatmul.mubr.f32.gmra.mxu0 %v1388
  %v1758 = vpop.f32.mrf.mxu0
  %v1759 = vadd.f32 %v1210, %v1758
  %v1760 = vpop.f32.mrf.mxu0
  %1761 = vmatprep.mubr.f32.mxu0 0.0
  %1762 = vmatmul.mubr.f32.gmra.mxu0 %v1391
  %v1763 = vpop.f32.mrf.mxu0
  %v1764 = vadd.f32 %v1210, %v1763
  %v1765 = vpop.f32.mrf.mxu0
  %1766 = vmatprep.mubr.f32.mxu0 0.0
  %1767 = vmatmul.mubr.f32.gmra.mxu0 %v1394
  %v1768 = vpop.f32.mrf.mxu0
  %v1769 = vadd.f32 %v1210, %v1768
  %v1770 = vpop.f32.mrf.mxu0
  %1771 = vmatprep.mubr.f32.mxu0 0.0
  %1772 = vmatmul.mubr.f32.gmra.mxu0 %v1397
  %v1773 = vpop.f32.mrf.mxu0
  %v1774 = vadd.f32 %v1210, %v1773
  %v1775 = vpop.f32.mrf.mxu0
  %1776 = vmatprep.mubr.f32.mxu0 0.0
  %1777 = vmatmul.mubr.f32.gmra.mxu0 %v1400
  %v1778 = vpop.f32.mrf.mxu0
  %v1779 = vadd.f32 %v1210, %v1778
  %v1780 = vpop.f32.mrf.mxu0
  %1781 = vdwg.mxu0
  %vm1782 = vcmask 261120
  %1783 = vst.msk [vmem:[%s7] sm:$0xff] %vm1782, %v1469
  %1784 = vst.msk [vmem:[%s7 + $0x8] sm:$0xff] %vm1782, %v1474
  %1785 = vst.msk [vmem:[%s7 + $0x10] sm:$0xff] %vm1782, %v1479
  %1786 = vst.msk [vmem:[%s7 + $0x18] sm:$0xff] %vm1782, %v1484
  %1787 = vst.msk [vmem:[%s7 + $0x20] sm:$0xff] %vm1782, %v1489
  %1788 = vst.msk [vmem:[%s7 + $0x28] sm:$0xff] %vm1782, %v1494
  %1789 = vst.msk [vmem:[%s7 + $0x30] sm:$0xff] %vm1782, %v1499
  %1790 = vst.msk [vmem:[%s7 + $0x38] sm:$0xff] %vm1782, %v1504
  %1791 = vst.msk [vmem:[%s7 + $0x40] sm:$0xff] %vm1782, %v1509
  %1792 = vst.msk [vmem:[%s7 + $0x48] sm:$0xff] %vm1782, %v1514
  %1793 = vst.msk [vmem:[%s7 + $0x50] sm:$0xff] %vm1782, %v1519
  %1794 = vst.msk [vmem:[%s7 + $0x58] sm:$0xff] %vm1782, %v1524
  %1795 = vst.msk [vmem:[%s7 + $0x60] sm:$0xff] %vm1782, %v1529
  %1796 = vst.msk [vmem:[%s7 + $0x68] sm:$0xff] %vm1782, %v1534
  %1797 = vst.msk [vmem:[%s7 + $0x70] sm:$0xff] %vm1782, %v1539
  %1798 = vst.msk [vmem:[%s7 + $0x78] sm:$0xff] %vm1782, %v1544
  %1799 = vst.msk [vmem:[%s7 + $0x80] sm:$0xff] %vm1782, %v1549
  %1800 = vst.msk [vmem:[%s7 + $0x88] sm:$0xff] %vm1782, %v1554
  %1801 = vst.msk [vmem:[%s7 + $0x90] sm:$0xff] %vm1782, %v1559
  %1802 = vst.msk [vmem:[%s7 + $0x98] sm:$0xff] %vm1782, %v1564
  %1803 = vst.msk [vmem:[%s7 + $0xa0] sm:$0xff] %vm1782, %v1569
  %1804 = vst.msk [vmem:[%s7 + $0xa8] sm:$0xff] %vm1782, %v1574
  %1805 = vst.msk [vmem:[%s7 + $0xb0] sm:$0xff] %vm1782, %v1579
  %1806 = vst.msk [vmem:[%s7 + $0xb8] sm:$0xff] %vm1782, %v1584
  %1807 = vst.msk [vmem:[%s7 + $0xc0] sm:$0xff] %vm1782, %v1589
  %1808 = vst.msk [vmem:[%s7 + $0xc8] sm:$0xff] %vm1782, %v1594
  %1809 = vst.msk [vmem:[%s7 + $0xd0] sm:$0xff] %vm1782, %v1599
  %1810 = vst.msk [vmem:[%s7 + $0xd8] sm:$0xff] %vm1782, %v1604
  %1811 = vst.msk [vmem:[%s7 + $0xe0] sm:$0xff] %vm1782, %v1609
  %1812 = vst.msk [vmem:[%s7 + $0xe8] sm:$0xff] %vm1782, %v1614
  %1813 = vst.msk [vmem:[%s7 + $0xf0] sm:$0xff] %vm1782, %v1619
  %1814 = vst.msk [vmem:[%s7 + $0xf8] sm:$0xff] %vm1782, %v1624
  %1815 = vst.msk [vmem:[%s7 + $0x100] sm:$0xff] %vm1782, %v1629
  %1816 = vst.msk [vmem:[%s7 + $0x108] sm:$0xff] %vm1782, %v1634
  %1817 = vst.msk [vmem:[%s7 + $0x110] sm:$0xff] %vm1782, %v1639
  %1818 = vst.msk [vmem:[%s7 + $0x118] sm:$0xff] %vm1782, %v1644
  %1819 = vst.msk [vmem:[%s7 + $0x120] sm:$0xff] %vm1782, %v1649
  %1820 = vst.msk [vmem:[%s7 + $0x128] sm:$0xff] %vm1782, %v1654
  %1821 = vst.msk [vmem:[%s7 + $0x130] sm:$0xff] %vm1782, %v1659
  %1822 = vst.msk [vmem:[%s7 + $0x138] sm:$0xff] %vm1782, %v1664
  %1823 = vst.msk [vmem:[%s7 + $0x140] sm:$0xff] %vm1782, %v1669
  %1824 = vst.msk [vmem:[%s7 + $0x148] sm:$0xff] %vm1782, %v1674
  %1825 = vst.msk [vmem:[%s7 + $0x150] sm:$0xff] %vm1782, %v1679
  %1826 = vst.msk [vmem:[%s7 + $0x158] sm:$0xff] %vm1782, %v1684
  %1827 = vst.msk [vmem:[%s7 + $0x160] sm:$0xff] %vm1782, %v1689
  %1828 = vst.msk [vmem:[%s7 + $0x168] sm:$0xff] %vm1782, %v1694
  %1829 = vst.msk [vmem:[%s7 + $0x170] sm:$0xff] %vm1782, %v1699
  %1830 = vst.msk [vmem:[%s7 + $0x178] sm:$0xff] %vm1782, %v1704
  %1831 = vst.msk [vmem:[%s7 + $0x180] sm:$0xff] %vm1782, %v1709
  %1832 = vst.msk [vmem:[%s7 + $0x188] sm:$0xff] %vm1782, %v1714
  %1833 = vst.msk [vmem:[%s7 + $0x190] sm:$0xff] %vm1782, %v1719
  %1834 = vst.msk [vmem:[%s7 + $0x198] sm:$0xff] %vm1782, %v1724
  %1835 = vst.msk [vmem:[%s7 + $0x1a0] sm:$0xff] %vm1782, %v1729
  %1836 = vst.msk [vmem:[%s7 + $0x1a8] sm:$0xff] %vm1782, %v1734
  %1837 = vst.msk [vmem:[%s7 + $0x1b0] sm:$0xff] %vm1782, %v1739
  %1838 = vst.msk [vmem:[%s7 + $0x1b8] sm:$0xff] %vm1782, %v1744
  %1839 = vst.msk [vmem:[%s7 + $0x1c0] sm:$0xff] %vm1782, %v1749
  %1840 = vst.msk [vmem:[%s7 + $0x1c8] sm:$0xff] %vm1782, %v1754
  %1841 = vst.msk [vmem:[%s7 + $0x1d0] sm:$0xff] %vm1782, %v1759
  %1842 = vst.msk [vmem:[%s7 + $0x1d8] sm:$0xff] %vm1782, %v1764
  %1843 = vst.msk [vmem:[%s7 + $0x1e0] sm:$0xff] %vm1782, %v1769
  %1844 = vst.msk [vmem:[%s7 + $0x1e8] sm:$0xff] %vm1782, %v1774
  %vm1845 = vcmask 257024
  %1846 = vst.msk [vmem:[%s7 + $0x1f0] sm:$0xf] %vm1845, %v1779
  // Predicated region
  $region30: #{player_embedding_forward.1} parent=0 // pred_check
    _
  $region31: #{player_embedding_forward.1} parent=0 // pred_check_branch
    %1848 = sbr.rel (0) target = $region33
  $region32: #{player_embedding_forward.1} parent=0 // pred_region
    _
  $region33: #{player_embedding_forward.1} parent=0 // pred_fallthru
    _
  // Predicated region
  $region34: #{player_embedding_forward.1} parent=0 // pred_check
    _
  $region35: #{player_embedding_forward.1} parent=0 // pred_check_branch
    %1850 = sbr.rel (0) target = $region37
  $region36: #{player_embedding_forward.1} parent=0 // pred_region
    _
  $region37: #{player_embedding_forward.1} parent=0 // pred_fallthru
    _

</llo_original>
